<compile_context>
chip_gen: v5e
topology: v5e:2x2
jax: 0.10.0
libtpu: 0.0.40
codegen_flags: <defaults>
</compile_context>

<pallas_src>
import functools
import math

import jax
import jax.numpy as jnp
from jax.experimental import pallas as pl
from jax.experimental.pallas import tpu as pltpu


# ----------------------------- small helpers ---------------------------------

_TM = 256                           # target rows per tile
_TK = 1024                          # K tile for the (unused) reduction fallback
_W_RESIDENT_BYTES = 8 * 1024 * 1024  # keep weight fully resident up to this size
_VMEM_LIMIT = 48 * 1024 * 1024      # scoped VMEM for the matmul kernels


def _round_up(v, m):
    return (v + m - 1) // m * m


def _choose_m_tile(M):
    """Pick a row tile.  Prefer a tile that divides M exactly (multiple of 8)
    so no activation padding / slicing is ever issued around the pallas_call."""
    if M <= _TM:
        return M, M
    for t in range(_TM, 7, -8):
        if M % t == 0:
            return t, M
    return _TM, _round_up(M, _TM)   # pathological M only (never hit here)


def _gelu_tanh(x):
    # tanh-approximate GELU: one EUP tanh + a handful of VPU ops per element.
    # (The exact f32 erf polynomial saturated the 4 VALU slots on v6e/v7x;
    # max deviation from torch's exact erf GELU is ~1e-3, below bf16 noise.)
    c = 0.7978845608028654  # sqrt(2/pi)
    return 0.5 * x * (1.0 + jnp.tanh(c * (x + 0.044715 * (x * x * x))))


# ------------------------ matmul (+ optional GELU) -----------------------------

def _linear_kernel(x_ref, w_ref, b_ref, o_ref, *, activation):
    # Single-K, full-N: no accumulator scratch, no pl.when init/writeback.
    y = jnp.dot(x_ref[...], w_ref[...], preferred_element_type=jnp.float32)
    y = y + b_ref[...]
    if activation == "gelu":
        y = _gelu_tanh(y)
    o_ref[...] = y.astype(o_ref.dtype)


def _linear_acc_kernel(x_ref, w_ref, b_ref, o_ref, acc_ref, *, activation):
    # K-reduction fallback (not reached by ViT shapes).
    @pl.when(pl.program_id(1) == 0)
    def _():
        acc_ref[...] = jnp.zeros_like(acc_ref)

    acc_ref[...] += jnp.dot(x_ref[...], w_ref[...],
                            preferred_element_type=jnp.float32)

    @pl.when(pl.program_id(1) == pl.num_programs(1) - 1)
    def _():
        y = acc_ref[...] + b_ref[...]
        if activation == "gelu":
            y = _gelu_tanh(y)
        o_ref[...] = y.astype(o_ref.dtype)


def linear(x, w, b, activation=None, out_dtype=jnp.bfloat16):
    """y = act(x @ w + b).  bf16 MXU inputs, f32 epilogue.  The (K, N) weight
    block index is constant across the grid -> fetched from HBM once."""
    M, K = x.shape
    Kw, N = w.shape
    assert K == Kw
    tm, Mp = _choose_m_tile(M)

    x = x.astype(jnp.bfloat16)
    w = w.astype(jnp.bfloat16)
    b = b.astype(jnp.float32).reshape(1, N)
    if Mp != M:                      # never hit by the shapes used here
        x = jnp.pad(x, ((0, Mp - M), (0, 0)))

    if K * N * 2 <= _W_RESIDENT_BYTES:
        out = pl.pallas_call(
            functools.partial(_linear_kernel, activation=activation),
            out_shape=jax.ShapeDtypeStruct((Mp, N), out_dtype),
            grid=(Mp // tm,),
            in_specs=[pl.BlockSpec((tm, K), lambda i: (i, 0)),
                      pl.BlockSpec((K, N), lambda i: (0, 0)),   # resident weight
                      pl.BlockSpec((1, N), lambda i: (0, 0))],
            out_specs=pl.BlockSpec((tm, N), lambda i: (i, 0)),
            compiler_params=pltpu.CompilerParams(
                dimension_semantics=("parallel",),
                vmem_limit_bytes=_VMEM_LIMIT),
        )(x, w, b)
    else:
        tk = _TK
        Kp = _round_up(K, tk)
        if Kp != K:
            x = jnp.pad(x, ((0, 0), (0, Kp - K)))
            w = jnp.pad(w, ((0, Kp - K), (0, 0)))
        out = pl.pallas_call(
            functools.partial(_linear_acc_kernel, activation=activation),
            out_shape=jax.ShapeDtypeStruct((Mp, N), out_dtype),
            grid=(Mp // tm, Kp // tk),
            in_specs=[pl.BlockSpec((tm, tk), lambda i, k: (i, k)),
                      pl.BlockSpec((tk, N), lambda i, k: (k, 0)),
                      pl.BlockSpec((1, N), lambda i, k: (0, 0))],
            out_specs=pl.BlockSpec((tm, N), lambda i, k: (i, 0)),
            scratch_shapes=[pltpu.VMEM((tm, N), jnp.float32)],
            compiler_params=pltpu.CompilerParams(
                dimension_semantics=("parallel", "arbitrary"),
                vmem_limit_bytes=_VMEM_LIMIT),
        )(x, w, b)

    if Mp != M:
        out = out[:M]
    return out


# ----------------- fused matmul + residual add + LayerNorm --------------------

def _linear_res_ln_kernel(x_ref, w_ref, b_ref, r_ref, g_ref, be_ref, o_ref,
                          *, eps):
    y = jnp.dot(x_ref[...], w_ref[...], preferred_element_type=jnp.float32)
    y = y + b_ref[...] + r_ref[...].astype(jnp.float32)
    mu = jnp.mean(y, axis=-1, keepdims=True)
    yc = y - mu
    var = jnp.mean(yc * yc, axis=-1, keepdims=True)    # biased var (torch LN)
    y = yc * jax.lax.rsqrt(var + eps)
    o_ref[...] = (y * g_ref[...] + be_ref[...]).astype(o_ref.dtype)


def linear_residual_ln(x, w, b, res, gamma, beta, eps, out_dtype=jnp.bfloat16):
    """LayerNorm(res + (x @ w + b)) over the last axis, fully fused.
    Single-K / full-N: the whole (K, N) weight stays VMEM-resident."""
    M, K = x.shape
    _, N = w.shape
    tm, Mp = _choose_m_tile(M)

    x = x.astype(jnp.bfloat16)
    w = w.astype(jnp.bfloat16)
    res = res.astype(jnp.bfloat16)
    b = b.astype(jnp.float32).reshape(1, N)
    gamma = gamma.astype(jnp.float32).reshape(1, N)
    beta = beta.astype(jnp.float32).reshape(1, N)
    if Mp != M:                      # never hit by the shapes used here
        x = jnp.pad(x, ((0, Mp - M), (0, 0)))
        res = jnp.pad(res, ((0, Mp - M), (0, 0)))

    out = pl.pallas_call(
        functools.partial(_linear_res_ln_kernel, eps=eps),
        out_shape=jax.ShapeDtypeStruct((Mp, N), out_dtype),
        grid=(Mp // tm,),
        in_specs=[pl.BlockSpec((tm, K), lambda i: (i, 0)),
                  pl.BlockSpec((K, N), lambda i: (0, 0)),      # resident weight
                  pl.BlockSpec((1, N), lambda i: (0, 0)),
                  pl.BlockSpec((tm, N), lambda i: (i, 0)),
                  pl.BlockSpec((1, N), lambda i: (0, 0)),
                  pl.BlockSpec((1, N), lambda i: (0, 0))],
        out_specs=pl.BlockSpec((tm, N), lambda i: (i, 0)),
        compiler_params=pltpu.CompilerParams(
            dimension_semantics=("parallel",),
            vmem_limit_bytes=_VMEM_LIMIT),
    )(x, w, b, res, gamma, beta)
    if Mp != M:
        out = out[:M]
    return out


# ----------------------------- standalone LayerNorm ---------------------------

def _ln_kernel(x_ref, g_ref, b_ref, o_ref, *, eps):
    x = x_ref[...].astype(jnp.float32)
    mu = jnp.mean(x, axis=-1, keepdims=True)
    xc = x - mu
    var = jnp.mean(xc * xc, axis=-1, keepdims=True)
    y = xc * jax.lax.rsqrt(var + eps)
    o_ref[...] = (y * g_ref[...] + b_ref[...]).astype(o_ref.dtype)


def layernorm(x, gamma, beta, eps, out_dtype=jnp.bfloat16):
    M, E = x.shape
    tm, Mp = _choose_m_tile(M)
    if Mp != M:
        x = jnp.pad(x, ((0, Mp - M), (0, 0)))
    out = pl.pallas_call(
        functools.partial(_ln_kernel, eps=eps),
        out_shape=jax.ShapeDtypeStruct((Mp, E), out_dtype),
        grid=(Mp // tm,),
        in_specs=[pl.BlockSpec((tm, E), lambda i: (i, 0)),
                  pl.BlockSpec((1, E), lambda i: (0, 0)),
                  pl.BlockSpec((1, E), lambda i: (0, 0))],
        out_specs=pl.BlockSpec((tm, E), lambda i: (i, 0)),
        compiler_params=pltpu.CompilerParams(dimension_semantics=("parallel",)),
    )(x, gamma.astype(jnp.float32).reshape(1, E),
      beta.astype(jnp.float32).reshape(1, E))
    if Mp != M:
        out = out[:M]
    return out


# --------------------------------- attention ----------------------------------

def _attn_kernel(qkv_ref, o_ref, *, scale, seq_len):
    # qkv_ref: (3, S_pad, Dh) for one (batch, head) — fully lane-dense blocks,
    # no sub-128-lane head slicing or concatenation inside the kernel.
    q = qkv_ref[0]
    k = qkv_ref[1]
    v = qkv_ref[2]
    s = jax.lax.dot_general(q, k, (((1,), (1,)), ((), ())),
                            preferred_element_type=jnp.float32) * scale
    if seq_len != s.shape[-1]:       # mask padded KEY tokens
        key_idx = jax.lax.broadcasted_iota(jnp.int32, s.shape, 1)
        s = jnp.where(key_idx < seq_len, s, -1e30)
    m = jnp.max(s, axis=-1, keepdims=True)
    p = jnp.exp(s - m)
    l = jnp.sum(p, axis=-1, keepdims=True)
    p = p * (1.0 / l)                # exact normalization ((S,1) divide is cheap)
    o = jnp.dot(p.astype(v.dtype), v, preferred_element_type=jnp.float32)
    o_ref[...] = o.astype(o_ref.dtype)


def attention(qkv, num_heads, seq_len, scale):
    """qkv: (B, S_pad, 3E) -> (B*S_pad, E) multi-head self-attention with a
    (batch, head) grid.  One XLA rearrange builds a head-major
    (3, B, H, S_pad, Dh) layout; the inverse rearrange restores token-major."""
    B, S_pad, threeE = qkv.shape
    E = threeE // 3
    Dh = E // num_heads
    qkv5 = qkv.reshape(B, S_pad, 3, num_heads, Dh).transpose(2, 0, 3, 1, 4)
    out = pl.pallas_call(
        functools.partial(_attn_kernel, scale=scale, seq_len=seq_len),
        out_shape=jax.ShapeDtypeStruct((B, num_heads, S_pad, Dh), jnp.bfloat16),
        grid=(B, num_heads),
        in_specs=[pl.BlockSpec((3, None, None, S_pad, Dh),
                               lambda b, h: (0, b, h, 0, 0))],
        out_specs=pl.BlockSpec((None, None, S_pad, Dh),
                               lambda b, h: (b, h, 0, 0)),
        compiler_params=pltpu.CompilerParams(
            dimension_semantics=("parallel", "parallel")),
    )(qkv5)
    return out.transpose(0, 2, 1, 3).reshape(B * S_pad, E)


# -------------------------------- parameters ----------------------------------

def init_params(key, *, num_classes, num_layers, image_size, patch_size,
                num_channels, em_dim, num_heads, ff_dim):
    del num_heads
    n_tokens = (image_size // patch_size) ** 2 + 1
    keys = jax.random.split(key, 5 + num_layers)

    def w(k, shape, scale=0.02, dtype=jnp.float32):
        return (scale * jax.random.normal(k, shape, jnp.float32)).astype(dtype)

    patch_dim = num_channels * patch_size * patch_size
    params = {
        # Conv2d(stride=kernel, bias=False) weight pre-flattened in (c,u,v)
        # order and pre-transposed to (C*ps*ps, em_dim), stored bf16.
        "patch_w": w(keys[0], (patch_dim, em_dim), dtype=jnp.bfloat16),
        "patch_b": jnp.zeros((1, em_dim), jnp.float32),
        "pos_emb": w(keys[1], (1, n_tokens, em_dim)),
        "cls_token": w(keys[2], (1, 1, em_dim)),
        "final_ln_g": jnp.ones((1, em_dim), jnp.float32),
        "final_ln_b": jnp.zeros((1, em_dim), jnp.float32),
        # classifier weight pre-transposed to (em_dim, num_classes)
        "cls_w": w(keys[3], (em_dim, num_classes), dtype=jnp.bfloat16),
        "cls_b": w(keys[4], (1, num_classes)),
        "layers": [],
    }
    for li in range(num_layers):
        lk = jax.random.split(keys[5 + li], 8)
        params["layers"].append({
            # matmul weights pre-transposed (K, N) bf16; biases / LN affine
            # params pre-shaped (1, N) float32 (hoisted out of the fwd pass).
            "in_proj_w": w(lk[0], (em_dim, 3 * em_dim), dtype=jnp.bfloat16),
            "in_proj_b": w(lk[1], (1, 3 * em_dim)),
            "out_proj_w": w(lk[2], (em_dim, em_dim), dtype=jnp.bfloat16),
            "out_proj_b": w(lk[3], (1, em_dim)),
            "ln1_g": jnp.ones((1, em_dim), jnp.float32),
            "ln1_b": jnp.zeros((1, em_dim), jnp.float32),
            "lin1_w": w(lk[4], (em_dim, ff_dim), dtype=jnp.bfloat16),
            "lin1_b": w(lk[5], (1, ff_dim)),
            "lin2_w": w(lk[6], (ff_dim, em_dim), dtype=jnp.bfloat16),
            "lin2_b": w(lk[7], (1, em_dim)),
            "ln2_g": jnp.ones((1, em_dim), jnp.float32),
            "ln2_b": jnp.zeros((1, em_dim), jnp.float32),
        })
    return params


# --------------------------------- forward ------------------------------------

def vit_forward(x, params, cfg):
    B, C, H, W = x.shape
    ps = cfg["patch_size"]
    E = cfg["em_dim"]
    Hd = cfg["num_heads"]
    nh, nw = H // ps, W // ps
    num_patches = nh * nw
    S = num_patches + 1
    S_pad = _round_up(S, 8)
    Dh = E // Hd
    scale = 1.0 / math.sqrt(Dh)

    # --- ViTEmbeddings: Conv2d(stride=kernel) == per-patch matmul -------------
    patches = x.reshape(B, C, nh, ps, nw, ps).transpose(0, 2, 4, 1, 3, 5)
    patches = patches.reshape(B * num_patches, C * ps * ps)      # (c,u,v) order
    emb = linear(patches, params["patch_w"], params["patch_b"],
                 out_dtype=jnp.float32)
    emb = emb.reshape(B, num_patches, E)

    cls = jnp.broadcast_to(params["cls_token"], (B, 1, E))
    tokens = jnp.concatenate([cls, emb], axis=1) + params["pos_emb"]  # (B, S, E)
    # Pad the sequence ONCE (S -> multiple of 8) and carry the padded layout
    # through all layers; padded rows are inert (row-wise ops only) and padded
    # KEY tokens are masked inside the attention kernel.
    if S_pad != S:
        tokens = jnp.pad(tokens, ((0, 0), (0, S_pad - S), (0, 0)))
    # TODO(synk): nn.Dropout layers are identity here (inference / eval mode).

    h = tokens.reshape(B * S_pad, E).astype(jnp.bfloat16)

    # --- TransformerEncoder (post-norm layers, eps=1e-5) ----------------------
    for lp in params["layers"]:
        # self-attention block
        qkv = linear(h, lp["in_proj_w"], lp["in_proj_b"])         # (B*S_pad, 3E)
        a = attention(qkv.reshape(B, S_pad, 3 * E), Hd, S, scale)  # (B*S_pad, E)
        h = linear_residual_ln(a, lp["out_proj_w"], lp["out_proj_b"], res=h,
                               gamma=lp["ln1_g"], beta=lp["ln1_b"], eps=1e-5)
        # feed-forward block (tanh-approx GELU fused into the first matmul)
        ff = linear(h, lp["lin1_w"], lp["lin1_b"], activation="gelu")
        h = linear_residual_ln(ff, lp["lin2_w"], lp["lin2_b"], res=h,
                               gamma=lp["ln2_g"], beta=lp["ln2_b"], eps=1e-5)

    # --- CLS token (seq position 0), final LayerNorm(eps=1e-6), classifier ----
    cls_out = h.reshape(B, S_pad, E)[:, 0, :]                     # (B, E)
    cls_out = layernorm(cls_out, params["final_ln_g"], params["final_ln_b"],
                        eps=1e-6)
    logits = linear(cls_out, params["cls_w"], params["cls_b"],
                    out_dtype=jnp.float32)                        # (B, classes)
    return logits


# ----------------------------------- main --------------------------------------

if __name__ == "__main__":
    cfg = dict(num_classes=10, num_layers=2, image_size=16, patch_size=4,
               num_channels=3, em_dim=32, num_heads=4, ff_dim=64)

    key = jax.random.PRNGKey(0)
    pkey, xkey = jax.random.split(key)
    params = init_params(pkey, **cfg)
    x = jax.random.normal(
        xkey, (2, cfg["num_channels"], cfg["image_size"], cfg["image_size"]),
        jnp.float32)

    fwd = jax.jit(functools.partial(vit_forward, cfg=cfg))
    out = fwd(x, params)
    jax.block_until_ready(out)

    assert out.shape == (2, cfg["num_classes"]), out.shape
    assert out.dtype == jnp.float32
    assert bool(jnp.all(jnp.isfinite(out)))
    print("KERNEL_OK")
</pallas_src>

<mosaic_0001>
module attributes {stable_mosaic.version = 11 : i64} {
  func.func @_linear_kernel(%arg0: i32, %arg1: memref<32x48xbf16, #tpu.memory_space<vmem>>, %arg2: memref<48x32xbf16, #tpu.memory_space<vmem>>, %arg3: memref<1x32xf32, #tpu.memory_space<vmem>>, %arg4: memref<32x32xf32, #tpu.memory_space<vmem>>) attributes {dimension_semantics = [#tpu.dimension_semantics<parallel>], iteration_bounds = array<i64: 1>, scalar_prefetch = 0 : i64, scratch_operands = 0 : i64, tpu.core_type = #tpu.core_type<tc>, window_params = [{transform_indices = @transform_0, window_bounds = array<i64: 32, 48>}, {pipeline_mode = #tpu.pipeline_mode<synchronous>, transform_indices = @transform_1, window_bounds = array<i64: 48, 32>}, {pipeline_mode = #tpu.pipeline_mode<synchronous>, transform_indices = @transform_2, window_bounds = array<i64: 1, 32>}, {transform_indices = @transform_3, window_bounds = array<i64: 32, 32>}]} {
    %c0 = arith.constant 0 : index
    %c0_0 = arith.constant 0 : index
    %0 = vector.load %arg1[%c0, %c0_0] : memref<32x48xbf16, #tpu.memory_space<vmem>>, vector<32x48xbf16>
    %c0_1 = arith.constant 0 : index
    %c0_2 = arith.constant 0 : index
    %1 = vector.load %arg2[%c0_1, %c0_2] : memref<48x32xbf16, #tpu.memory_space<vmem>>, vector<48x32xbf16>
    %cst = arith.constant dense<0.000000e+00> : vector<32x32xf32>
    %2 = tpu.matmul %0, %1, %cst {dimension_numbers = #tpu.dot_dimension_numbers<[1], [0], [0], [1], [0, 0, 1, 1], [], []>} : vector<32x48xbf16>, vector<48x32xbf16>, vector<32x32xf32> -> vector<32x32xf32>
    %c0_3 = arith.constant 0 : index
    %c0_4 = arith.constant 0 : index
    %3 = vector.load %arg3[%c0_3, %c0_4] : memref<1x32xf32, #tpu.memory_space<vmem>>, vector<1x32xf32>
    %4 = vector.broadcast %3 : vector<1x32xf32> to vector<32x32xf32>
    %5 = arith.addf %2, %4 : vector<32x32xf32>
    %c0_5 = arith.constant 0 : index
    %c0_6 = arith.constant 0 : index
    %6 = vector.load %arg4[%c0_5, %c0_6] : memref<32x32xf32, #tpu.memory_space<vmem>>, vector<32x32xf32>
    tpu.vector_store %arg4[%c0_5, %c0_6], %5 {strides = array<i32>} : memref<32x32xf32, #tpu.memory_space<vmem>>, vector<32x32xf32>,
    return
  }
  func.func @transform_0(%arg0: i32) -> (i32, i32) {
    %c0_i32 = arith.constant 0 : i32
    %c0_i32_0 = arith.constant 0 : i32
    return %arg0, %c0_i32 : i32, i32
  }
  func.func @transform_1(%arg0: i32) -> (i32, i32) {
    %c0_i32 = arith.constant 0 : i32
    %c0_i32_0 = arith.constant 0 : i32
    %c0_i32_1 = arith.constant 0 : i32
    return %c0_i32, %c0_i32_0 : i32, i32
  }
  func.func @transform_2(%arg0: i32) -> (i32, i32) {
    %c0_i32 = arith.constant 0 : i32
    %c0_i32_0 = arith.constant 0 : i32
    %c0_i32_1 = arith.constant 0 : i32
    return %c0_i32, %c0_i32_0 : i32, i32
  }
  func.func @transform_3(%arg0: i32) -> (i32, i32) {
    %c0_i32 = arith.constant 0 : i32
    %c0_i32_0 = arith.constant 0 : i32
    return %arg0, %c0_i32 : i32, i32
  }
}

module attributes {stable_mosaic.version = 11 : i64} {
  func.func @_linear_kernel(%arg0: i32, %arg1: memref<48x32xbf16, #tpu.memory_space<vmem>>, %arg2: memref<32x96xbf16, #tpu.memory_space<vmem>>, %arg3: memref<1x96xf32, #tpu.memory_space<vmem>>, %arg4: memref<48x96xbf16, #tpu.memory_space<vmem>>) attributes {dimension_semantics = [#tpu.dimension_semantics<parallel>], iteration_bounds = array<i64: 1>, scalar_prefetch = 0 : i64, scratch_operands = 0 : i64, tpu.core_type = #tpu.core_type<tc>, window_params = [{transform_indices = @transform_0, window_bounds = array<i64: 48, 32>}, {pipeline_mode = #tpu.pipeline_mode<synchronous>, transform_indices = @transform_1, window_bounds = array<i64: 32, 96>}, {pipeline_mode = #tpu.pipeline_mode<synchronous>, transform_indices = @transform_2, window_bounds = array<i64: 1, 96>}, {transform_indices = @transform_3, window_bounds = array<i64: 48, 96>}]} {
    %c0 = arith.constant 0 : index
    %c0_0 = arith.constant 0 : index
    %0 = vector.load %arg1[%c0, %c0_0] : memref<48x32xbf16, #tpu.memory_space<vmem>>, vector<48x32xbf16>
    %c0_1 = arith.constant 0 : index
    %c0_2 = arith.constant 0 : index
    %1 = vector.load %arg2[%c0_1, %c0_2] : memref<32x96xbf16, #tpu.memory_space<vmem>>, vector<32x96xbf16>
    %cst = arith.constant dense<0.000000e+00> : vector<48x96xf32>
    %2 = tpu.matmul %0, %1, %cst {dimension_numbers = #tpu.dot_dimension_numbers<[1], [0], [0], [1], [0, 0, 1, 1], [], []>} : vector<48x32xbf16>, vector<32x96xbf16>, vector<48x96xf32> -> vector<48x96xf32>
    %c0_3 = arith.constant 0 : index
    %c0_4 = arith.constant 0 : index
    %3 = vector.load %arg3[%c0_3, %c0_4] : memref<1x96xf32, #tpu.memory_space<vmem>>, vector<1x96xf32>
    %4 = vector.broadcast %3 : vector<1x96xf32> to vector<48x96xf32>
    %5 = arith.addf %2, %4 : vector<48x96xf32>
    %6 = arith.truncf %5 : vector<48x96xf32> to vector<48x96xbf16>
    %c0_5 = arith.constant 0 : index
    %c0_6 = arith.constant 0 : index
    %7 = vector.load %arg4[%c0_5, %c0_6] : memref<48x96xbf16, #tpu.memory_space<vmem>>, vector<48x96xbf16>
    tpu.vector_store %arg4[%c0_5, %c0_6], %6 {strides = array<i32>} : memref<48x96xbf16, #tpu.memory_space<vmem>>, vector<48x96xbf16>,
    return
  }
  func.func @transform_0(%arg0: i32) -> (i32, i32) {
    %c0_i32 = arith.constant 0 : i32
    %c0_i32_0 = arith.constant 0 : i32
    return %arg0, %c0_i32 : i32, i32
  }
  func.func @transform_1(%arg0: i32) -> (i32, i32) {
    %c0_i32 = arith.constant 0 : i32
    %c0_i32_0 = arith.constant 0 : i32
    %c0_i32_1 = arith.constant 0 : i32
    return %c0_i32, %c0_i32_0 : i32, i32
  }
  func.func @transform_2(%arg0: i32) -> (i32, i32) {
    %c0_i32 = arith.constant 0 : i32
    %c0_i32_0 = arith.constant 0 : i32
    %c0_i32_1 = arith.constant 0 : i32
    return %c0_i32, %c0_i32_0 : i32, i32
  }
  func.func @transform_3(%arg0: i32) -> (i32, i32) {
    %c0_i32 = arith.constant 0 : i32
    %c0_i32_0 = arith.constant 0 : i32
    return %arg0, %c0_i32 : i32, i32
  }
}

module attributes {stable_mosaic.version = 11 : i64} {
  func.func @_attn_kernel(%arg0: i32, %arg1: i32, %arg2: memref<3x1x1x24x8xbf16, #tpu.memory_space<vmem>>, %arg3: memref<1x1x24x8xbf16, #tpu.memory_space<vmem>>) attributes {dimension_semantics = [#tpu.dimension_semantics<parallel>, #tpu.dimension_semantics<parallel>], iteration_bounds = array<i64: 2, 4>, scalar_prefetch = 0 : i64, scratch_operands = 0 : i64, tpu.core_type = #tpu.core_type<tc>, window_params = [{transform_indices = @transform_0, window_bounds = array<i64: 3, 1, 1, 24, 8>}, {transform_indices = @transform_1, window_bounds = array<i64: 1, 1, 24, 8>}]} {
    %c0 = arith.constant 0 : index
    %c0_0 = arith.constant 0 : index
    %c0_1 = arith.constant 0 : index
    %c0_2 = arith.constant 0 : index
    %c0_3 = arith.constant 0 : index
    %0 = vector.load %arg2[%c0, %c0_0, %c0_1, %c0_2, %c0_3] : memref<3x1x1x24x8xbf16, #tpu.memory_space<vmem>>, vector<1x1x1x24x8xbf16>
    %1 = vector.shape_cast %0 : vector<1x1x1x24x8xbf16> to vector<24x8xbf16>
    %c1 = arith.constant 1 : index
    %c0_4 = arith.constant 0 : index
    %c0_5 = arith.constant 0 : index
    %c0_6 = arith.constant 0 : index
    %c0_7 = arith.constant 0 : index
    %2 = vector.load %arg2[%c1, %c0_4, %c0_5, %c0_6, %c0_7] : memref<3x1x1x24x8xbf16, #tpu.memory_space<vmem>>, vector<1x1x1x24x8xbf16>
    %3 = vector.shape_cast %2 : vector<1x1x1x24x8xbf16> to vector<24x8xbf16>
    %c2 = arith.constant 2 : index
    %c0_8 = arith.constant 0 : index
    %c0_9 = arith.constant 0 : index
    %c0_10 = arith.constant 0 : index
    %c0_11 = arith.constant 0 : index
    %4 = vector.load %arg2[%c2, %c0_8, %c0_9, %c0_10, %c0_11] : memref<3x1x1x24x8xbf16, #tpu.memory_space<vmem>>, vector<1x1x1x24x8xbf16>
    %5 = vector.shape_cast %4 : vector<1x1x1x24x8xbf16> to vector<24x8xbf16>
    %cst = arith.constant dense<0.000000e+00> : vector<24x24xf32>
    %6 = tpu.matmul %1, %3, %cst {dimension_numbers = #tpu.dot_dimension_numbers<[1], [1], [0], [0], [0, 0, 1, 0], [], []>} : vector<24x8xbf16>, vector<24x8xbf16>, vector<24x24xf32> -> vector<24x24xf32>
    %cst_12 = arith.constant 0.353553385 : f32
    %7 = vector.broadcast %cst_12 : f32 to vector<24x24xf32>
    %8 = arith.mulf %6, %7 : vector<24x24xf32>
    %9 = tpu.iota {dimensions = array<i32: 1>} : vector<24x24xi32>
    %c17_i32 = arith.constant 17 : i32
    %10 = vector.broadcast %c17_i32 : i32 to vector<24x24xi32>
    %11 = arith.cmpi slt, %9, %10 : vector<24x24xi32>
    %cst_13 = arith.constant -1.000000e+30 : f32
    %12 = vector.broadcast %cst_13 : f32 to vector<24x24xf32>
    %13 = arith.select %11, %8, %12 : vector<24x24xi1>, vector<24x24xf32>
    %cst_14 = arith.constant dense<0xFF800000> : vector<24xf32>
    %14 = vector.multi_reduction <maximumf>, %13, %cst_14 [1] : vector<24x24xf32> to vector<24xf32>
    %15 = vector.shape_cast %14 : vector<24xf32> to vector<24x1xf32>
    %16 = vector.broadcast %15 : vector<24x1xf32> to vector<24x24xf32>
    %17 = arith.subf %13, %16 : vector<24x24xf32>
    %18 = math.exp %17 : vector<24x24xf32>
    %cst_15 = arith.constant dense<0.000000e+00> : vector<24xf32>
    %19 = vector.multi_reduction <add>, %18, %cst_15 [1] : vector<24x24xf32> to vector<24xf32>
    %20 = vector.shape_cast %19 : vector<24xf32> to vector<24x1xf32>
    %cst_16 = arith.constant 1.000000e+00 : f32
    %21 = vector.broadcast %cst_16 : f32 to vector<24x1xf32>
    %22 = arith.divf %21, %20 : vector<24x1xf32>
    %23 = vector.broadcast %22 : vector<24x1xf32> to vector<24x24xf32>
    %24 = arith.mulf %18, %23 : vector<24x24xf32>
    %25 = arith.truncf %24 : vector<24x24xf32> to vector<24x24xbf16>
    %cst_17 = arith.constant dense<0.000000e+00> : vector<24x8xf32>
    %26 = tpu.matmul %25, %5, %cst_17 {dimension_numbers = #tpu.dot_dimension_numbers<[1], [0], [0], [1], [0, 0, 1, 1], [], []>} : vector<24x24xbf16>, vector<24x8xbf16>, vector<24x8xf32> -> vector<24x8xf32>
    %27 = arith.truncf %26 : vector<24x8xf32> to vector<24x8xbf16>
    %c0_18 = arith.constant 0 : index
    %c0_19 = arith.constant 0 : index
    %c0_20 = arith.constant 0 : index
    %c0_21 = arith.constant 0 : index
    %28 = vector.load %arg3[%c0_18, %c0_19, %c0_20, %c0_21] : memref<1x1x24x8xbf16, #tpu.memory_space<vmem>>, vector<1x1x24x8xbf16>
    %29 = vector.shape_cast %28 : vector<1x1x24x8xbf16> to vector<24x8xbf16>
    %30 = vector.shape_cast %27 : vector<24x8xbf16> to vector<1x1x24x8xbf16>
    tpu.vector_store %arg3[%c0_18, %c0_19, %c0_20, %c0_21], %30 {strides = array<i32>} : memref<1x1x24x8xbf16, #tpu.memory_space<vmem>>, vector<1x1x24x8xbf16>,
    return
  }
  func.func @transform_0(%arg0: i32, %arg1: i32) -> (i32, i32, i32, i32, i32) {
    %c0_i32 = arith.constant 0 : i32
    %c0_i32_0 = arith.constant 0 : i32
    %c0_i32_1 = arith.constant 0 : i32
    %c0_i32_2 = arith.constant 0 : i32
    return %c0_i32, %arg0, %arg1, %c0_i32_0, %c0_i32_1 : i32, i32, i32, i32, i32
  }
  func.func @transform_1(%arg0: i32, %arg1: i32) -> (i32, i32, i32, i32) {
    %c0_i32 = arith.constant 0 : i32
    %c0_i32_0 = arith.constant 0 : i32
    %c0_i32_1 = arith.constant 0 : i32
    return %arg0, %arg1, %c0_i32, %c0_i32_0 : i32, i32, i32, i32
  }
}

module attributes {stable_mosaic.version = 11 : i64} {
  func.func @_linear_res_ln_kernel(%arg0: i32, %arg1: memref<48x32xbf16, #tpu.memory_space<vmem>>, %arg2: memref<32x32xbf16, #tpu.memory_space<vmem>>, %arg3: memref<1x32xf32, #tpu.memory_space<vmem>>, %arg4: memref<48x32xbf16, #tpu.memory_space<vmem>>, %arg5: memref<1x32xf32, #tpu.memory_space<vmem>>, %arg6: memref<1x32xf32, #tpu.memory_space<vmem>>, %arg7: memref<48x32xbf16, #tpu.memory_space<vmem>>) attributes {dimension_semantics = [#tpu.dimension_semantics<parallel>], iteration_bounds = array<i64: 1>, scalar_prefetch = 0 : i64, scratch_operands = 0 : i64, tpu.core_type = #tpu.core_type<tc>, window_params = [{transform_indices = @transform_0, window_bounds = array<i64: 48, 32>}, {pipeline_mode = #tpu.pipeline_mode<synchronous>, transform_indices = @transform_1, window_bounds = array<i64: 32, 32>}, {pipeline_mode = #tpu.pipeline_mode<synchronous>, transform_indices = @transform_2, window_bounds = array<i64: 1, 32>}, {transform_indices = @transform_3, window_bounds = array<i64: 48, 32>}, {pipeline_mode = #tpu.pipeline_mode<synchronous>, transform_indices = @transform_4, window_bounds = array<i64: 1, 32>}, {pipeline_mode = #tpu.pipeline_mode<synchronous>, transform_indices = @transform_5, window_bounds = array<i64: 1, 32>}, {transform_indices = @transform_6, window_bounds = array<i64: 48, 32>}]} {
    %c0 = arith.constant 0 : index
    %c0_0 = arith.constant 0 : index
    %0 = vector.load %arg1[%c0, %c0_0] : memref<48x32xbf16, #tpu.memory_space<vmem>>, vector<48x32xbf16>
    %c0_1 = arith.constant 0 : index
    %c0_2 = arith.constant 0 : index
    %1 = vector.load %arg2[%c0_1, %c0_2] : memref<32x32xbf16, #tpu.memory_space<vmem>>, vector<32x32xbf16>
    %cst = arith.constant dense<0.000000e+00> : vector<48x32xf32>
    %2 = tpu.matmul %0, %1, %cst {dimension_numbers = #tpu.dot_dimension_numbers<[1], [0], [0], [1], [0, 0, 1, 1], [], []>} : vector<48x32xbf16>, vector<32x32xbf16>, vector<48x32xf32> -> vector<48x32xf32>
    %c0_3 = arith.constant 0 : index
    %c0_4 = arith.constant 0 : index
    %3 = vector.load %arg3[%c0_3, %c0_4] : memref<1x32xf32, #tpu.memory_space<vmem>>, vector<1x32xf32>
    %4 = vector.broadcast %3 : vector<1x32xf32> to vector<48x32xf32>
    %5 = arith.addf %2, %4 : vector<48x32xf32>
    %c0_5 = arith.constant 0 : index
    %c0_6 = arith.constant 0 : index
    %6 = vector.load %arg4[%c0_5, %c0_6] : memref<48x32xbf16, #tpu.memory_space<vmem>>, vector<48x32xbf16>
    %7 = arith.extf %6 : vector<48x32xbf16> to vector<48x32xf32>
    %8 = arith.addf %5, %7 : vector<48x32xf32>
    %cst_7 = arith.constant dense<0.000000e+00> : vector<48xf32>
    %9 = vector.multi_reduction <add>, %8, %cst_7 [1] : vector<48x32xf32> to vector<48xf32>
    %10 = vector.shape_cast %9 : vector<48xf32> to vector<48x1xf32>
    %cst_8 = arith.constant 3.200000e+01 : f32
    %11 = vector.broadcast %cst_8 : f32 to vector<48x1xf32>
    %12 = arith.divf %10, %11 : vector<48x1xf32>
    %13 = vector.broadcast %12 : vector<48x1xf32> to vector<48x32xf32>
    %14 = arith.subf %8, %13 : vector<48x32xf32>
    %15 = arith.mulf %14, %14 : vector<48x32xf32>
    %cst_9 = arith.constant dense<0.000000e+00> : vector<48xf32>
    %16 = vector.multi_reduction <add>, %15, %cst_9 [1] : vector<48x32xf32> to vector<48xf32>
    %17 = vector.shape_cast %16 : vector<48xf32> to vector<48x1xf32>
    %cst_10 = arith.constant 3.200000e+01 : f32
    %18 = vector.broadcast %cst_10 : f32 to vector<48x1xf32>
    %19 = arith.divf %17, %18 : vector<48x1xf32>
    %cst_11 = arith.constant 9.99999974E-6 : f32
    %20 = vector.broadcast %cst_11 : f32 to vector<48x1xf32>
    %21 = arith.addf %19, %20 : vector<48x1xf32>
    %22 = math.rsqrt %21 : vector<48x1xf32>
    %23 = vector.broadcast %22 : vector<48x1xf32> to vector<48x32xf32>
    %24 = arith.mulf %14, %23 : vector<48x32xf32>
    %c0_12 = arith.constant 0 : index
    %c0_13 = arith.constant 0 : index
    %25 = vector.load %arg5[%c0_12, %c0_13] : memref<1x32xf32, #tpu.memory_space<vmem>>, vector<1x32xf32>
    %26 = vector.broadcast %25 : vector<1x32xf32> to vector<48x32xf32>
    %27 = arith.mulf %24, %26 : vector<48x32xf32>
    %c0_14 = arith.constant 0 : index
    %c0_15 = arith.constant 0 : index
    %28 = vector.load %arg6[%c0_14, %c0_15] : memref<1x32xf32, #tpu.memory_space<vmem>>, vector<1x32xf32>
    %29 = vector.broadcast %28 : vector<1x32xf32> to vector<48x32xf32>
    %30 = arith.addf %27, %29 : vector<48x32xf32>
    %31 = arith.truncf %30 : vector<48x32xf32> to vector<48x32xbf16>
    %c0_16 = arith.constant 0 : index
    %c0_17 = arith.constant 0 : index
    %32 = vector.load %arg7[%c0_16, %c0_17] : memref<48x32xbf16, #tpu.memory_space<vmem>>, vector<48x32xbf16>
    tpu.vector_store %arg7[%c0_16, %c0_17], %31 {strides = array<i32>} : memref<48x32xbf16, #tpu.memory_space<vmem>>, vector<48x32xbf16>,
    return
  }
  func.func @transform_0(%arg0: i32) -> (i32, i32) {
    %c0_i32 = arith.constant 0 : i32
    %c0_i32_0 = arith.constant 0 : i32
    return %arg0, %c0_i32 : i32, i32
  }
  func.func @transform_1(%arg0: i32) -> (i32, i32) {
    %c0_i32 = arith.constant 0 : i32
    %c0_i32_0 = arith.constant 0 : i32
    %c0_i32_1 = arith.constant 0 : i32
    return %c0_i32, %c0_i32_0 : i32, i32
  }
  func.func @transform_2(%arg0: i32) -> (i32, i32) {
    %c0_i32 = arith.constant 0 : i32
    %c0_i32_0 = arith.constant 0 : i32
    %c0_i32_1 = arith.constant 0 : i32
    return %c0_i32, %c0_i32_0 : i32, i32
  }
  func.func @transform_3(%arg0: i32) -> (i32, i32) {
    %c0_i32 = arith.constant 0 : i32
    %c0_i32_0 = arith.constant 0 : i32
    return %arg0, %c0_i32 : i32, i32
  }
  func.func @transform_4(%arg0: i32) -> (i32, i32) {
    %c0_i32 = arith.constant 0 : i32
    %c0_i32_0 = arith.constant 0 : i32
    %c0_i32_1 = arith.constant 0 : i32
    return %c0_i32, %c0_i32_0 : i32, i32
  }
  func.func @transform_5(%arg0: i32) -> (i32, i32) {
    %c0_i32 = arith.constant 0 : i32
    %c0_i32_0 = arith.constant 0 : i32
    %c0_i32_1 = arith.constant 0 : i32
    return %c0_i32, %c0_i32_0 : i32, i32
  }
  func.func @transform_6(%arg0: i32) -> (i32, i32) {
    %c0_i32 = arith.constant 0 : i32
    %c0_i32_0 = arith.constant 0 : i32
    return %arg0, %c0_i32 : i32, i32
  }
}

module attributes {stable_mosaic.version = 11 : i64} {
  func.func @_linear_kernel(%arg0: i32, %arg1: memref<48x32xbf16, #tpu.memory_space<vmem>>, %arg2: memref<32x64xbf16, #tpu.memory_space<vmem>>, %arg3: memref<1x64xf32, #tpu.memory_space<vmem>>, %arg4: memref<48x64xbf16, #tpu.memory_space<vmem>>) attributes {dimension_semantics = [#tpu.dimension_semantics<parallel>], iteration_bounds = array<i64: 1>, scalar_prefetch = 0 : i64, scratch_operands = 0 : i64, tpu.core_type = #tpu.core_type<tc>, window_params = [{transform_indices = @transform_0, window_bounds = array<i64: 48, 32>}, {pipeline_mode = #tpu.pipeline_mode<synchronous>, transform_indices = @transform_1, window_bounds = array<i64: 32, 64>}, {pipeline_mode = #tpu.pipeline_mode<synchronous>, transform_indices = @transform_2, window_bounds = array<i64: 1, 64>}, {transform_indices = @transform_3, window_bounds = array<i64: 48, 64>}]} {
    %c0 = arith.constant 0 : index
    %c0_0 = arith.constant 0 : index
    %0 = vector.load %arg1[%c0, %c0_0] : memref<48x32xbf16, #tpu.memory_space<vmem>>, vector<48x32xbf16>
    %c0_1 = arith.constant 0 : index
    %c0_2 = arith.constant 0 : index
    %1 = vector.load %arg2[%c0_1, %c0_2] : memref<32x64xbf16, #tpu.memory_space<vmem>>, vector<32x64xbf16>
    %cst = arith.constant dense<0.000000e+00> : vector<48x64xf32>
    %2 = tpu.matmul %0, %1, %cst {dimension_numbers = #tpu.dot_dimension_numbers<[1], [0], [0], [1], [0, 0, 1, 1], [], []>} : vector<48x32xbf16>, vector<32x64xbf16>, vector<48x64xf32> -> vector<48x64xf32>
    %c0_3 = arith.constant 0 : index
    %c0_4 = arith.constant 0 : index
    %3 = vector.load %arg3[%c0_3, %c0_4] : memref<1x64xf32, #tpu.memory_space<vmem>>, vector<1x64xf32>
    %4 = vector.broadcast %3 : vector<1x64xf32> to vector<48x64xf32>
    %5 = arith.addf %2, %4 : vector<48x64xf32>
    %cst_5 = arith.constant 5.000000e-01 : f32
    %6 = vector.broadcast %cst_5 : f32 to vector<48x64xf32>
    %7 = arith.mulf %6, %5 : vector<48x64xf32>
    %8 = arith.mulf %5, %5 : vector<48x64xf32>
    %9 = arith.mulf %8, %5 : vector<48x64xf32>
    %cst_6 = arith.constant 4.471500e-02 : f32
    %10 = vector.broadcast %cst_6 : f32 to vector<48x64xf32>
    %11 = arith.mulf %10, %9 : vector<48x64xf32>
    %12 = arith.addf %5, %11 : vector<48x64xf32>
    %cst_7 = arith.constant 0.797884583 : f32
    %13 = vector.broadcast %cst_7 : f32 to vector<48x64xf32>
    %14 = arith.mulf %13, %12 : vector<48x64xf32>
    %15 = math.tanh %14 : vector<48x64xf32>
    %cst_8 = arith.constant 1.000000e+00 : f32
    %16 = vector.broadcast %cst_8 : f32 to vector<48x64xf32>
    %17 = arith.addf %16, %15 : vector<48x64xf32>
    %18 = arith.mulf %7, %17 : vector<48x64xf32>
    %19 = arith.truncf %18 : vector<48x64xf32> to vector<48x64xbf16>
    %c0_9 = arith.constant 0 : index
    %c0_10 = arith.constant 0 : index
    %20 = vector.load %arg4[%c0_9, %c0_10] : memref<48x64xbf16, #tpu.memory_space<vmem>>, vector<48x64xbf16>
    tpu.vector_store %arg4[%c0_9, %c0_10], %19 {strides = array<i32>} : memref<48x64xbf16, #tpu.memory_space<vmem>>, vector<48x64xbf16>,
    return
  }
  func.func @transform_0(%arg0: i32) -> (i32, i32) {
    %c0_i32 = arith.constant 0 : i32
    %c0_i32_0 = arith.constant 0 : i32
    return %arg0, %c0_i32 : i32, i32
  }
  func.func @transform_1(%arg0: i32) -> (i32, i32) {
    %c0_i32 = arith.constant 0 : i32
    %c0_i32_0 = arith.constant 0 : i32
    %c0_i32_1 = arith.constant 0 : i32
    return %c0_i32, %c0_i32_0 : i32, i32
  }
  func.func @transform_2(%arg0: i32) -> (i32, i32) {
    %c0_i32 = arith.constant 0 : i32
    %c0_i32_0 = arith.constant 0 : i32
    %c0_i32_1 = arith.constant 0 : i32
    return %c0_i32, %c0_i32_0 : i32, i32
  }
  func.func @transform_3(%arg0: i32) -> (i32, i32) {
    %c0_i32 = arith.constant 0 : i32
    %c0_i32_0 = arith.constant 0 : i32
    return %arg0, %c0_i32 : i32, i32
  }
}

module attributes {stable_mosaic.version = 11 : i64} {
  func.func @_linear_res_ln_kernel(%arg0: i32, %arg1: memref<48x64xbf16, #tpu.memory_space<vmem>>, %arg2: memref<64x32xbf16, #tpu.memory_space<vmem>>, %arg3: memref<1x32xf32, #tpu.memory_space<vmem>>, %arg4: memref<48x32xbf16, #tpu.memory_space<vmem>>, %arg5: memref<1x32xf32, #tpu.memory_space<vmem>>, %arg6: memref<1x32xf32, #tpu.memory_space<vmem>>, %arg7: memref<48x32xbf16, #tpu.memory_space<vmem>>) attributes {dimension_semantics = [#tpu.dimension_semantics<parallel>], iteration_bounds = array<i64: 1>, scalar_prefetch = 0 : i64, scratch_operands = 0 : i64, tpu.core_type = #tpu.core_type<tc>, window_params = [{transform_indices = @transform_0, window_bounds = array<i64: 48, 64>}, {pipeline_mode = #tpu.pipeline_mode<synchronous>, transform_indices = @transform_1, window_bounds = array<i64: 64, 32>}, {pipeline_mode = #tpu.pipeline_mode<synchronous>, transform_indices = @transform_2, window_bounds = array<i64: 1, 32>}, {transform_indices = @transform_3, window_bounds = array<i64: 48, 32>}, {pipeline_mode = #tpu.pipeline_mode<synchronous>, transform_indices = @transform_4, window_bounds = array<i64: 1, 32>}, {pipeline_mode = #tpu.pipeline_mode<synchronous>, transform_indices = @transform_5, window_bounds = array<i64: 1, 32>}, {transform_indices = @transform_6, window_bounds = array<i64: 48, 32>}]} {
    %c0 = arith.constant 0 : index
    %c0_0 = arith.constant 0 : index
    %0 = vector.load %arg1[%c0, %c0_0] : memref<48x64xbf16, #tpu.memory_space<vmem>>, vector<48x64xbf16>
    %c0_1 = arith.constant 0 : index
    %c0_2 = arith.constant 0 : index
    %1 = vector.load %arg2[%c0_1, %c0_2] : memref<64x32xbf16, #tpu.memory_space<vmem>>, vector<64x32xbf16>
    %cst = arith.constant dense<0.000000e+00> : vector<48x32xf32>
    %2 = tpu.matmul %0, %1, %cst {dimension_numbers = #tpu.dot_dimension_numbers<[1], [0], [0], [1], [0, 0, 1, 1], [], []>} : vector<48x64xbf16>, vector<64x32xbf16>, vector<48x32xf32> -> vector<48x32xf32>
    %c0_3 = arith.constant 0 : index
    %c0_4 = arith.constant 0 : index
    %3 = vector.load %arg3[%c0_3, %c0_4] : memref<1x32xf32, #tpu.memory_space<vmem>>, vector<1x32xf32>
    %4 = vector.broadcast %3 : vector<1x32xf32> to vector<48x32xf32>
    %5 = arith.addf %2, %4 : vector<48x32xf32>
    %c0_5 = arith.constant 0 : index
    %c0_6 = arith.constant 0 : index
    %6 = vector.load %arg4[%c0_5, %c0_6] : memref<48x32xbf16, #tpu.memory_space<vmem>>, vector<48x32xbf16>
    %7 = arith.extf %6 : vector<48x32xbf16> to vector<48x32xf32>
    %8 = arith.addf %5, %7 : vector<48x32xf32>
    %cst_7 = arith.constant dense<0.000000e+00> : vector<48xf32>
    %9 = vector.multi_reduction <add>, %8, %cst_7 [1] : vector<48x32xf32> to vector<48xf32>
    %10 = vector.shape_cast %9 : vector<48xf32> to vector<48x1xf32>
    %cst_8 = arith.constant 3.200000e+01 : f32
    %11 = vector.broadcast %cst_8 : f32 to vector<48x1xf32>
    %12 = arith.divf %10, %11 : vector<48x1xf32>
    %13 = vector.broadcast %12 : vector<48x1xf32> to vector<48x32xf32>
    %14 = arith.subf %8, %13 : vector<48x32xf32>
    %15 = arith.mulf %14, %14 : vector<48x32xf32>
    %cst_9 = arith.constant dense<0.000000e+00> : vector<48xf32>
    %16 = vector.multi_reduction <add>, %15, %cst_9 [1] : vector<48x32xf32> to vector<48xf32>
    %17 = vector.shape_cast %16 : vector<48xf32> to vector<48x1xf32>
    %cst_10 = arith.constant 3.200000e+01 : f32
    %18 = vector.broadcast %cst_10 : f32 to vector<48x1xf32>
    %19 = arith.divf %17, %18 : vector<48x1xf32>
    %cst_11 = arith.constant 9.99999974E-6 : f32
    %20 = vector.broadcast %cst_11 : f32 to vector<48x1xf32>
    %21 = arith.addf %19, %20 : vector<48x1xf32>
    %22 = math.rsqrt %21 : vector<48x1xf32>
    %23 = vector.broadcast %22 : vector<48x1xf32> to vector<48x32xf32>
    %24 = arith.mulf %14, %23 : vector<48x32xf32>
    %c0_12 = arith.constant 0 : index
    %c0_13 = arith.constant 0 : index
    %25 = vector.load %arg5[%c0_12, %c0_13] : memref<1x32xf32, #tpu.memory_space<vmem>>, vector<1x32xf32>
    %26 = vector.broadcast %25 : vector<1x32xf32> to vector<48x32xf32>
    %27 = arith.mulf %24, %26 : vector<48x32xf32>
    %c0_14 = arith.constant 0 : index
    %c0_15 = arith.constant 0 : index
    %28 = vector.load %arg6[%c0_14, %c0_15] : memref<1x32xf32, #tpu.memory_space<vmem>>, vector<1x32xf32>
    %29 = vector.broadcast %28 : vector<1x32xf32> to vector<48x32xf32>
    %30 = arith.addf %27, %29 : vector<48x32xf32>
    %31 = arith.truncf %30 : vector<48x32xf32> to vector<48x32xbf16>
    %c0_16 = arith.constant 0 : index
    %c0_17 = arith.constant 0 : index
    %32 = vector.load %arg7[%c0_16, %c0_17] : memref<48x32xbf16, #tpu.memory_space<vmem>>, vector<48x32xbf16>
    tpu.vector_store %arg7[%c0_16, %c0_17], %31 {strides = array<i32>} : memref<48x32xbf16, #tpu.memory_space<vmem>>, vector<48x32xbf16>,
    return
  }
  func.func @transform_0(%arg0: i32) -> (i32, i32) {
    %c0_i32 = arith.constant 0 : i32
    %c0_i32_0 = arith.constant 0 : i32
    return %arg0, %c0_i32 : i32, i32
  }
  func.func @transform_1(%arg0: i32) -> (i32, i32) {
    %c0_i32 = arith.constant 0 : i32
    %c0_i32_0 = arith.constant 0 : i32
    %c0_i32_1 = arith.constant 0 : i32
    return %c0_i32, %c0_i32_0 : i32, i32
  }
  func.func @transform_2(%arg0: i32) -> (i32, i32) {
    %c0_i32 = arith.constant 0 : i32
    %c0_i32_0 = arith.constant 0 : i32
    %c0_i32_1 = arith.constant 0 : i32
    return %c0_i32, %c0_i32_0 : i32, i32
  }
  func.func @transform_3(%arg0: i32) -> (i32, i32) {
    %c0_i32 = arith.constant 0 : i32
    %c0_i32_0 = arith.constant 0 : i32
    return %arg0, %c0_i32 : i32, i32
  }
  func.func @transform_4(%arg0: i32) -> (i32, i32) {
    %c0_i32 = arith.constant 0 : i32
    %c0_i32_0 = arith.constant 0 : i32
    %c0_i32_1 = arith.constant 0 : i32
    return %c0_i32, %c0_i32_0 : i32, i32
  }
  func.func @transform_5(%arg0: i32) -> (i32, i32) {
    %c0_i32 = arith.constant 0 : i32
    %c0_i32_0 = arith.constant 0 : i32
    %c0_i32_1 = arith.constant 0 : i32
    return %c0_i32, %c0_i32_0 : i32, i32
  }
  func.func @transform_6(%arg0: i32) -> (i32, i32) {
    %c0_i32 = arith.constant 0 : i32
    %c0_i32_0 = arith.constant 0 : i32
    return %arg0, %c0_i32 : i32, i32
  }
}

module attributes {stable_mosaic.version = 11 : i64} {
  func.func @_ln_kernel(%arg0: i32, %arg1: memref<2x32xbf16, #tpu.memory_space<vmem>>, %arg2: memref<1x32xf32, #tpu.memory_space<vmem>>, %arg3: memref<1x32xf32, #tpu.memory_space<vmem>>, %arg4: memref<2x32xbf16, #tpu.memory_space<vmem>>) attributes {dimension_semantics = [#tpu.dimension_semantics<parallel>], iteration_bounds = array<i64: 1>, scalar_prefetch = 0 : i64, scratch_operands = 0 : i64, tpu.core_type = #tpu.core_type<tc>, window_params = [{transform_indices = @transform_0, window_bounds = array<i64: 2, 32>}, {pipeline_mode = #tpu.pipeline_mode<synchronous>, transform_indices = @transform_1, window_bounds = array<i64: 1, 32>}, {pipeline_mode = #tpu.pipeline_mode<synchronous>, transform_indices = @transform_2, window_bounds = array<i64: 1, 32>}, {transform_indices = @transform_3, window_bounds = array<i64: 2, 32>}]} {
    %c0 = arith.constant 0 : index
    %c0_0 = arith.constant 0 : index
    %0 = vector.load %arg1[%c0, %c0_0] : memref<2x32xbf16, #tpu.memory_space<vmem>>, vector<2x32xbf16>
    %1 = arith.extf %0 : vector<2x32xbf16> to vector<2x32xf32>
    %cst = arith.constant dense<0.000000e+00> : vector<2xf32>
    %2 = vector.multi_reduction <add>, %1, %cst [1] : vector<2x32xf32> to vector<2xf32>
    %3 = vector.shape_cast %2 : vector<2xf32> to vector<2x1xf32>
    %cst_1 = arith.constant 3.200000e+01 : f32
    %4 = vector.broadcast %cst_1 : f32 to vector<2x1xf32>
    %5 = arith.divf %3, %4 : vector<2x1xf32>
    %6 = vector.broadcast %5 : vector<2x1xf32> to vector<2x32xf32>
    %7 = arith.subf %1, %6 : vector<2x32xf32>
    %8 = arith.mulf %7, %7 : vector<2x32xf32>
    %cst_2 = arith.constant dense<0.000000e+00> : vector<2xf32>
    %9 = vector.multi_reduction <add>, %8, %cst_2 [1] : vector<2x32xf32> to vector<2xf32>
    %10 = vector.shape_cast %9 : vector<2xf32> to vector<2x1xf32>
    %cst_3 = arith.constant 3.200000e+01 : f32
    %11 = vector.broadcast %cst_3 : f32 to vector<2x1xf32>
    %12 = arith.divf %10, %11 : vector<2x1xf32>
    %cst_4 = arith.constant 9.99999997E-7 : f32
    %13 = vector.broadcast %cst_4 : f32 to vector<2x1xf32>
    %14 = arith.addf %12, %13 : vector<2x1xf32>
    %15 = math.rsqrt %14 : vector<2x1xf32>
    %16 = vector.broadcast %15 : vector<2x1xf32> to vector<2x32xf32>
    %17 = arith.mulf %7, %16 : vector<2x32xf32>
    %c0_5 = arith.constant 0 : index
    %c0_6 = arith.constant 0 : index
    %18 = vector.load %arg2[%c0_5, %c0_6] : memref<1x32xf32, #tpu.memory_space<vmem>>, vector<1x32xf32>
    %19 = vector.broadcast %18 : vector<1x32xf32> to vector<2x32xf32>
    %20 = arith.mulf %17, %19 : vector<2x32xf32>
    %c0_7 = arith.constant 0 : index
    %c0_8 = arith.constant 0 : index
    %21 = vector.load %arg3[%c0_7, %c0_8] : memref<1x32xf32, #tpu.memory_space<vmem>>, vector<1x32xf32>
    %22 = vector.broadcast %21 : vector<1x32xf32> to vector<2x32xf32>
    %23 = arith.addf %20, %22 : vector<2x32xf32>
    %24 = arith.truncf %23 : vector<2x32xf32> to vector<2x32xbf16>
    %c0_9 = arith.constant 0 : index
    %c0_10 = arith.constant 0 : index
    %25 = vector.load %arg4[%c0_9, %c0_10] : memref<2x32xbf16, #tpu.memory_space<vmem>>, vector<2x32xbf16>
    tpu.vector_store %arg4[%c0_9, %c0_10], %24 {strides = array<i32>} : memref<2x32xbf16, #tpu.memory_space<vmem>>, vector<2x32xbf16>,
    return
  }
  func.func @transform_0(%arg0: i32) -> (i32, i32) {
    %c0_i32 = arith.constant 0 : i32
    %c0_i32_0 = arith.constant 0 : i32
    return %arg0, %c0_i32 : i32, i32
  }
  func.func @transform_1(%arg0: i32) -> (i32, i32) {
    %c0_i32 = arith.constant 0 : i32
    %c0_i32_0 = arith.constant 0 : i32
    %c0_i32_1 = arith.constant 0 : i32
    return %c0_i32, %c0_i32_0 : i32, i32
  }
  func.func @transform_2(%arg0: i32) -> (i32, i32) {
    %c0_i32 = arith.constant 0 : i32
    %c0_i32_0 = arith.constant 0 : i32
    %c0_i32_1 = arith.constant 0 : i32
    return %c0_i32, %c0_i32_0 : i32, i32
  }
  func.func @transform_3(%arg0: i32) -> (i32, i32) {
    %c0_i32 = arith.constant 0 : i32
    %c0_i32_0 = arith.constant 0 : i32
    return %arg0, %c0_i32 : i32, i32
  }
}

module attributes {stable_mosaic.version = 11 : i64} {
  func.func @_linear_kernel(%arg0: i32, %arg1: memref<2x32xbf16, #tpu.memory_space<vmem>>, %arg2: memref<32x10xbf16, #tpu.memory_space<vmem>>, %arg3: memref<1x10xf32, #tpu.memory_space<vmem>>, %arg4: memref<2x10xf32, #tpu.memory_space<vmem>>) attributes {dimension_semantics = [#tpu.dimension_semantics<parallel>], iteration_bounds = array<i64: 1>, scalar_prefetch = 0 : i64, scratch_operands = 0 : i64, tpu.core_type = #tpu.core_type<tc>, window_params = [{transform_indices = @transform_0, window_bounds = array<i64: 2, 32>}, {pipeline_mode = #tpu.pipeline_mode<synchronous>, transform_indices = @transform_1, window_bounds = array<i64: 32, 10>}, {pipeline_mode = #tpu.pipeline_mode<synchronous>, transform_indices = @transform_2, window_bounds = array<i64: 1, 10>}, {transform_indices = @transform_3, window_bounds = array<i64: 2, 10>}]} {
    %c0 = arith.constant 0 : index
    %c0_0 = arith.constant 0 : index
    %0 = vector.load %arg1[%c0, %c0_0] : memref<2x32xbf16, #tpu.memory_space<vmem>>, vector<2x32xbf16>
    %c0_1 = arith.constant 0 : index
    %c0_2 = arith.constant 0 : index
    %1 = vector.load %arg2[%c0_1, %c0_2] : memref<32x10xbf16, #tpu.memory_space<vmem>>, vector<32x10xbf16>
    %cst = arith.constant dense<0.000000e+00> : vector<2x10xf32>
    %2 = tpu.matmul %0, %1, %cst {dimension_numbers = #tpu.dot_dimension_numbers<[1], [0], [0], [1], [0, 0, 1, 1], [], []>} : vector<2x32xbf16>, vector<32x10xbf16>, vector<2x10xf32> -> vector<2x10xf32>
    %c0_3 = arith.constant 0 : index
    %c0_4 = arith.constant 0 : index
    %3 = vector.load %arg3[%c0_3, %c0_4] : memref<1x10xf32, #tpu.memory_space<vmem>>, vector<1x10xf32>
    %4 = vector.broadcast %3 : vector<1x10xf32> to vector<2x10xf32>
    %5 = arith.addf %2, %4 : vector<2x10xf32>
    %c0_5 = arith.constant 0 : index
    %c0_6 = arith.constant 0 : index
    %6 = vector.load %arg4[%c0_5, %c0_6] : memref<2x10xf32, #tpu.memory_space<vmem>>, vector<2x10xf32>
    tpu.vector_store %arg4[%c0_5, %c0_6], %5 {strides = array<i32>} : memref<2x10xf32, #tpu.memory_space<vmem>>, vector<2x10xf32>,
    return
  }
  func.func @transform_0(%arg0: i32) -> (i32, i32) {
    %c0_i32 = arith.constant 0 : i32
    %c0_i32_0 = arith.constant 0 : i32
    return %arg0, %c0_i32 : i32, i32
  }
  func.func @transform_1(%arg0: i32) -> (i32, i32) {
    %c0_i32 = arith.constant 0 : i32
    %c0_i32_0 = arith.constant 0 : i32
    %c0_i32_1 = arith.constant 0 : i32
    return %c0_i32, %c0_i32_0 : i32, i32
  }
  func.func @transform_2(%arg0: i32) -> (i32, i32) {
    %c0_i32 = arith.constant 0 : i32
    %c0_i32_0 = arith.constant 0 : i32
    %c0_i32_1 = arith.constant 0 : i32
    return %c0_i32, %c0_i32_0 : i32, i32
  }
  func.func @transform_3(%arg0: i32) -> (i32, i32) {
    %c0_i32 = arith.constant 0 : i32
    %c0_i32_0 = arith.constant 0 : i32
    return %arg0, %c0_i32 : i32, i32
  }
}

</mosaic_0001>

<llo_original>
// kernel: vit_forward.14
$region0: #{vit_forward.14}
  #allocation0 [shape = 'u32[]', space=smem, size = 0x4, offset = 0x4, fixed_abs, tag = 'smem constant byte address 0x4 - core index']
  #allocation1 [shape = 'u32[72,128]{1,0:T(1,128)}', space=vmem, size = 0x9000, scoped, tag = 'internal scratch']
  %s0 = inlined_call_operand.vmem [shape: bf16[48,32], index: 0, kind: input, shape index: {}]
  %s1 = inlined_call_operand.vmem [shape: bf16[32,96], index: 1, kind: input, shape index: {}]
  %s2 = inlined_call_operand.vmem [shape: f32[1,96], index: 2, kind: input, shape index: {}]
  %s3 = inlined_call_operand.vmem [shape: bf16[48,96], index: 3, kind: output, shape index: {}]
  %s4 = sld [smem:[#allocation0]]
  $region22: #{vit_forward.14} parent=0
    _
  %s6 = ssub.s32 1, %s4
  %s7 = scalar_select 0, %s6, %s4
  // Predicated region
  $region2: #{vit_forward.14} parent=0 // pred_check
    _
  $region3: #{vit_forward.14} parent=0 // pred_check_branch
    %9 = sbr.rel (0) target = $region5
  $region4: #{vit_forward.14} parent=0 // pred_region
    _
  $region5: #{vit_forward.14} parent=0 // pred_fallthru
    _
  // Predicated region
  $region6: #{vit_forward.14} parent=0 // pred_check
    _
  $region7: #{vit_forward.14} parent=0 // pred_check_branch
    %11 = sbr.rel (0) target = $region9
  $region8: #{vit_forward.14} parent=0 // pred_region
    _
  $region9: #{vit_forward.14} parent=0 // pred_fallthru
    _
  // Predicated region
  $region10: #{vit_forward.14} parent=0 // pred_check
    _
  $region11: #{vit_forward.14} parent=0 // pred_check_branch
    %13 = sbr.rel (0) target = $region13
  $region12: #{vit_forward.14} parent=0 // pred_region
    _
  $region13: #{vit_forward.14} parent=0 // pred_fallthru
    _
  %v15 = vld [vmem:[%s0] sm:$0xf]
  %v16 = vld [vmem:[%s0 + $0x4] sm:$0xf]
  %v17 = vld [vmem:[%s0 + $0x8] sm:$0xf]
  %v18 = vld [vmem:[%s0 + $0xc] sm:$0xf]
  %v19 = vld [vmem:[%s0 + $0x10] sm:$0xf]
  %v20 = vld [vmem:[%s0 + $0x14] sm:$0xf]
  %v21 = vld [vmem:[%s1] sm:$0xf]
  %v22 = vld [vmem:[%s1 + $0x4] sm:$0xf]
  %v23 = vld [vmem:[%s1 + $0x8] sm:$0xf]
  %v24 = vld [vmem:[%s1 + $0xc] sm:$0xf]
  %v25 = vld [vmem:[%s2] sm:$0x1]
  %v27 = vperm.slane %v25, 0
  %v35 = vunpack.c.l.b16 %v15
  %v36 = vunpack.c.l.b16 %v16
  %v37 = vunpack.c.l.b16 %v17
  %v38 = vunpack.c.l.b16 %v18
  %v39 = vunpack.c.l.b16 %v19
  %v40 = vunpack.c.l.b16 %v20
  %v41 = vpack.c.b16 %v36, %v35
  %v42 = vpack.c.b16 %v38, %v37
  %v43 = vpack.c.b16 %v40, %v39
  %v48 = vunpack.c.l.b16 %v21
  %v49 = vunpack.c.l.b16 %v22
  %v50 = vunpack.c.l.b16 %v23
  %v51 = vunpack.c.l.b16 %v24
  %v52 = vpack.c.b16 %v49, %v48
  %v53 = vpack.c.b16 %v51, %v50
  %vm56 = vcmask 261120
  %v58 = vsel %vm56, %v41, 0
  %v61 = vsel %vm56, %v42, 0
  %v64 = vsel %vm56, %v43, 0
  %66 = vmatpush.bf16.msra.mxu0 0
  %67 = vmatpush.bf16.msra.mxu0 0
  %68 = vmatpush.bf16.msra.mxu0 0
  %69 = vmatpush.bf16.msra.mxu0 0
  %70 = vmatpush.bf16.msra.mxu0 0
  %71 = vmatpush.bf16.msra.mxu0 0
  %72 = vmatpush.bf16.msra.mxu0 %v53
  %73 = vmatpush.bf16.msra.mxu0 %v52
  %74 = vmatmul.bf16.gmra.mxu0 %v58
  %v75 = vpop.f32.mrf.mxu0
  %v76 = vadd.f32 %v27, %v75
  %v77 = vpop.f32.mrf.mxu0
  %v78 = vadd.f32 %v27, %v77
  %79 = vmatmul.bf16.gmra.mxu0 %v61
  %v80 = vpop.f32.mrf.mxu0
  %v81 = vadd.f32 %v27, %v80
  %v82 = vpop.f32.mrf.mxu0
  %v83 = vadd.f32 %v27, %v82
  %84 = vmatmul.bf16.gmra.mxu0 %v64
  %v85 = vpop.f32.mrf.mxu0
  %v86 = vadd.f32 %v27, %v85
  %v87 = vpop.f32.mrf.mxu0
  %v88 = vadd.f32 %v27, %v87
  %89 = vdwg.mxu0
  %v90 = vpack.c.bf16 %v76, %v76
  %v91 = vpack.c.bf16 %v78, %v78
  %v92 = vpack.c.bf16 %v81, %v81
  %v93 = vpack.c.bf16 %v83, %v83
  %v94 = vpack.c.bf16 %v86, %v86
  %v95 = vpack.c.bf16 %v88, %v88
  %vm96 = vcmask 781312
  %97 = vst.msk [vmem:[%s3] sm:$0xf] %vm96, %v90
  %98 = vst.msk [vmem:[%s3 + $0x4] sm:$0xf] %vm96, %v91
  %99 = vst.msk [vmem:[%s3 + $0x8] sm:$0xf] %vm96, %v92
  %100 = vst.msk [vmem:[%s3 + $0xc] sm:$0xf] %vm96, %v93
  %101 = vst.msk [vmem:[%s3 + $0x10] sm:$0xf] %vm96, %v94
  %102 = vst.msk [vmem:[%s3 + $0x14] sm:$0xf] %vm96, %v95
  // Predicated region
  $region14: #{vit_forward.14} parent=0 // pred_check
    _
  $region15: #{vit_forward.14} parent=0 // pred_check_branch
    %104 = sbr.rel (0) target = $region17
  $region16: #{vit_forward.14} parent=0 // pred_region
    _
  $region17: #{vit_forward.14} parent=0 // pred_fallthru
    _
  // Predicated region
  $region18: #{vit_forward.14} parent=0 // pred_check
    _
  $region19: #{vit_forward.14} parent=0 // pred_check_branch
    %106 = sbr.rel (0) target = $region21
  $region20: #{vit_forward.14} parent=0 // pred_region
    _
  $region21: #{vit_forward.14} parent=0 // pred_fallthru
    _

// kernel: vit_forward.13
$region0: #{vit_forward.13}
  #allocation0 [shape = 'u32[]', space=smem, size = 0x4, offset = 0x4, fixed_abs, tag = 'smem constant byte address 0x4 - core index']
  #allocation1 [shape = 'u32[72,128]{1,0:T(1,128)}', space=vmem, size = 0x9000, scoped, tag = 'internal scratch']
  %s0 = inlined_call_operand.vmem [shape: bf16[32,48], index: 0, kind: input, shape index: {}]
  %s1 = inlined_call_operand.vmem [shape: bf16[48,32], index: 1, kind: input, shape index: {}]
  %s2 = inlined_call_operand.vmem [shape: f32[1,32], index: 2, kind: input, shape index: {}]
  %s3 = inlined_call_operand.vmem [shape: f32[32,32], index: 3, kind: output, shape index: {}]
  %s4 = sld [smem:[#allocation0]]
  $region22: #{vit_forward.13} parent=0
    _
  %s6 = ssub.s32 1, %s4
  %s7 = scalar_select 0, %s6, %s4
  // Predicated region
  $region2: #{vit_forward.13} parent=0 // pred_check
    _
  $region3: #{vit_forward.13} parent=0 // pred_check_branch
    %9 = sbr.rel (0) target = $region5
  $region4: #{vit_forward.13} parent=0 // pred_region
    _
  $region5: #{vit_forward.13} parent=0 // pred_fallthru
    _
  // Predicated region
  $region6: #{vit_forward.13} parent=0 // pred_check
    _
  $region7: #{vit_forward.13} parent=0 // pred_check_branch
    %11 = sbr.rel (0) target = $region9
  $region8: #{vit_forward.13} parent=0 // pred_region
    _
  $region9: #{vit_forward.13} parent=0 // pred_fallthru
    _
  // Predicated region
  $region10: #{vit_forward.13} parent=0 // pred_check
    _
  $region11: #{vit_forward.13} parent=0 // pred_check_branch
    %13 = sbr.rel (0) target = $region13
  $region12: #{vit_forward.13} parent=0 // pred_region
    _
  $region13: #{vit_forward.13} parent=0 // pred_fallthru
    _
  %v15 = vld [vmem:[%s0] sm:$0xf]
  %v16 = vld [vmem:[%s0 + $0x4] sm:$0xf]
  %v17 = vld [vmem:[%s0 + $0x8] sm:$0xf]
  %v18 = vld [vmem:[%s0 + $0xc] sm:$0xf]
  %v19 = vld [vmem:[%s1] sm:$0xf]
  %v20 = vld [vmem:[%s1 + $0x4] sm:$0xf]
  %v21 = vld [vmem:[%s1 + $0x8] sm:$0xf]
  %v22 = vld [vmem:[%s1 + $0xc] sm:$0xf]
  %v23 = vld [vmem:[%s1 + $0x10] sm:$0xf]
  %v24 = vld [vmem:[%s1 + $0x14] sm:$0xf]
  %v25 = vld [vmem:[%s2] sm:$0x1]
  %v27 = vperm.slane %v25, 0
  %v33 = vunpack.c.l.b16 %v15
  %v34 = vunpack.c.l.b16 %v16
  %v35 = vunpack.c.l.b16 %v17
  %v36 = vunpack.c.l.b16 %v18
  %v37 = vpack.c.b16 %v34, %v33
  %v38 = vpack.c.b16 %v36, %v35
  %v45 = vunpack.c.l.b16 %v19
  %v46 = vunpack.c.l.b16 %v20
  %v47 = vunpack.c.l.b16 %v21
  %v48 = vunpack.c.l.b16 %v22
  %v49 = vunpack.c.l.b16 %v23
  %v50 = vunpack.c.l.b16 %v24
  %v51 = vpack.c.b16 %v46, %v45
  %v52 = vpack.c.b16 %v48, %v47
  %v53 = vpack.c.b16 %v50, %v49
  %vm57 = vcmask 392192
  %v59 = vsel %vm57, %v37, 0
  %v62 = vsel %vm57, %v38, 0
  %64 = vmatpush.bf16.msra.mxu0 0
  %65 = vmatpush.bf16.msra.mxu0 0
  %66 = vmatpush.bf16.msra.mxu0 0
  %67 = vmatpush.bf16.msra.mxu0 0
  %68 = vmatpush.bf16.msra.mxu0 0
  %69 = vmatpush.bf16.msra.mxu0 %v53
  %70 = vmatpush.bf16.msra.mxu0 %v52
  %71 = vmatpush.bf16.msra.mxu0 %v51
  %72 = vmatmul.bf16.gmra.mxu0 %v59
  %v73 = vpop.f32.mrf.mxu0
  %v74 = vadd.f32 %v27, %v73
  %v75 = vpop.f32.mrf.mxu0
  %v76 = vadd.f32 %v27, %v75
  %77 = vmatmul.bf16.gmra.mxu0 %v62
  %v78 = vpop.f32.mrf.mxu0
  %v79 = vadd.f32 %v27, %v78
  %v80 = vpop.f32.mrf.mxu0
  %v81 = vadd.f32 %v27, %v80
  %82 = vdwg.mxu0
  %vm83 = vcmask 261120
  %84 = vst.msk [vmem:[%s3] sm:$0xff] %vm83, %v74
  %85 = vst.msk [vmem:[%s3 + $0x8] sm:$0xff] %vm83, %v76
  %86 = vst.msk [vmem:[%s3 + $0x10] sm:$0xff] %vm83, %v79
  %87 = vst.msk [vmem:[%s3 + $0x18] sm:$0xff] %vm83, %v81
  // Predicated region
  $region14: #{vit_forward.13} parent=0 // pred_check
    _
  $region15: #{vit_forward.13} parent=0 // pred_check_branch
    %89 = sbr.rel (0) target = $region17
  $region16: #{vit_forward.13} parent=0 // pred_region
    _
  $region17: #{vit_forward.13} parent=0 // pred_fallthru
    _
  // Predicated region
  $region18: #{vit_forward.13} parent=0 // pred_check
    _
  $region19: #{vit_forward.13} parent=0 // pred_check_branch
    %91 = sbr.rel (0) target = $region21
  $region20: #{vit_forward.13} parent=0 // pred_region
    _
  $region21: #{vit_forward.13} parent=0 // pred_fallthru
    _

// kernel: vit_forward.15
$region0: #{vit_forward.15}
  #allocation0 [shape = 'u32[]', space=smem, size = 0x4, offset = 0x4, fixed_abs, tag = 'smem constant byte address 0x4 - core index']
  #allocation1 [shape = 'u32[72,128]{1,0:T(1,128)}', space=vmem, size = 0x9000, scoped, tag = 'internal scratch']
  %s0 = inlined_call_operand.vmem [shape: bf16[3,2,4,24,8], index: 0, kind: input, shape index: {}]
  %s1 = inlined_call_operand.vmem [shape: bf16[2,4,24,8], index: 1, kind: output, shape index: {}]
  %s2 = sld [smem:[#allocation0]]
  $region78: #{vit_forward.15} parent=0
    _
  %s4 = ssub.s32 1, %s2
  %s5 = scalar_select 0, %s4, %s2
  $region1: #{vit_forward.15} parent=0
    #allocation2 [shape = 'u8[36864]{0}', space=vmem, size = 0x9000, scoped, tag = 'input window, operand 0']
    loop: start=0, step=1, limit=10
    $region2: #{vit_forward.15} parent=1 // loop_pre_header
      _
    $region3: #{vit_forward.15} parent=1 // loop_header
      %s7 = sphi 0, %s11
      %p8 = scmp.ge.s32.totalorder %s7, 10
      %s14 = sphi 0, %s26
      %s15 = sphi 0, %s22
      %s16 = sphi 0, %s14
      %s17 = sphi 0, %s15
      %s18 = sphi 0, %s16
      %s19 = sphi 0, %s17
      %s31 = sphi 0, %s33
      %s34 = sphi 0, %s31
      %s35 = sphi 0, %s34
      %s51 = sphi 0, %s35
      %s59 = sphi 0, %s61
      %s62 = sphi 0, %s59
      %s63 = sphi 0, %s62
      %s79 = sphi 0, %s63
    $region4: #{vit_forward.15} parent=1 // loop_header_branch
      %10 = sbr.rel (%p8) target = $region8
    $region5: #{vit_forward.15} parent=1 // loop_body
      %s12 = ssub.s32 %s7, 1
      %s13 = ssub.s32 %s7, 2
      %s20 = sadd.s32 1, %s15
      %p21 = scmp.ge.s32.totalorder %s20, 4
      %s22 = scalar_select %p21, 0, %s20
      %s23 = sadd.s32 1, %s14
      %s24 = scalar_select %p21, %s23, %s14
      %p25 = scmp.ge.s32.totalorder %s24, 2
      %s26 = scalar_select %p25, 0, %s24
      %s27 = ssub.s32 %s14, %s26
      %s28 = ssub.s32 %s15, %s22
      %s29 = sor.u32 %s27, %s28
      %p30 = scmp.eq.s32.totalorder %s29, 0
      %s32 = sadd.s32 %s31, 1
      %s33 = scalar_select %p30, %s31, %s32
      %p36 = pneg %p30
      %p37 = scmp.eq.s32.totalorder %s7, 7
      %p38 = por %p36, %p37
      %p39 = scmp.ne.s32.totalorder %s31, %s34
      %p40 = scmp.eq.s32.totalorder %s7, 0
      %p41 = por %p39, %p40
      %p42 = scmp.ne.s32.totalorder %s31, %s34
      %p43 = scmp.eq.s32.totalorder %s12, 7
      %p44 = por %p42, %p43
      %p45 = scmp.ne.s32.totalorder %s34, %s35
      %p46 = scmp.eq.s32.totalorder %s12, 0
      %p47 = por %p45, %p46
      %p48 = scmp.ne.s32.totalorder %s34, %s35
      %p49 = scmp.eq.s32.totalorder %s13, 7
      %p50 = por %p48, %p49
      %p52 = scmp.ne.s32.totalorder %s35, %s51
      %p53 = scmp.eq.s32.totalorder %s13, 0
      %p54 = por %p52, %p53
      %s55 = ssub.s32 %s14, %s26
      %s56 = ssub.s32 %s15, %s22
      %s57 = sor.u32 %s55, %s56
      %p58 = scmp.eq.s32.totalorder %s57, 0
      %s60 = sadd.s32 %s59, 1
      %s61 = scalar_select %p58, %s59, %s60
      %p64 = pneg %p58
      %p65 = scmp.eq.s32.totalorder %s7, 7
      %p66 = por %p64, %p65
      %p67 = scmp.ne.s32.totalorder %s59, %s62
      %p68 = scmp.eq.s32.totalorder %s7, 0
      %p69 = por %p67, %p68
      %p70 = scmp.ne.s32.totalorder %s59, %s62
      %p71 = scmp.eq.s32.totalorder %s12, 7
      %p72 = por %p70, %p71
      %p73 = scmp.ne.s32.totalorder %s62, %s63
      %p74 = scmp.eq.s32.totalorder %s12, 0
      %p75 = por %p73, %p74
      %p76 = scmp.ne.s32.totalorder %s62, %s63
      %p77 = scmp.eq.s32.totalorder %s13, 7
      %p78 = por %p76, %p77
      %p80 = scmp.ne.s32.totalorder %s63, %s79
      %p81 = scmp.eq.s32.totalorder %s13, 0
      %p82 = por %p80, %p81
      %p83 = scmp.le.s32.totalorder 1, %s7
      %p84 = scmp.lt.s32.totalorder %s7, 9
      %p85 = pnand %p83, %p84
      %p86 = pneg %p85
      // Predicated region
      $region9: #{vit_forward.15} parent=5 // pred_check
        _
      $region10: #{vit_forward.15} parent=5 // pred_check_branch
        %88 = sbr.rel (%p85) target = $region12
      $region11: #{vit_forward.15} parent=5 // pred_region
        %s89 = ssub.s32 %s7, 1
      $region12: #{vit_forward.15} parent=5 // pred_fallthru
        _
      %p90 = scmp.lt.s32.totalorder %s7, 8
      // Predicated region
      $region13: #{vit_forward.15} parent=5 // pred_check
        %p91 = pneg %p90
      $region14: #{vit_forward.15} parent=5 // pred_check_branch
        %93 = sbr.rel (%p91) target = $region16
      $region15: #{vit_forward.15} parent=5 // pred_region
        // Predicated region
        $region17: #{vit_forward.15} parent=15 // pred_check
          %p94 = pneg %p41
        $region18: #{vit_forward.15} parent=15 // pred_check_branch
          %96 = sbr.rel (%p94) target = $region20
        $region19: #{vit_forward.15} parent=15 // pred_region
          %s97 = sand.u32 %s31, 1
          %s98 = sand.u32 %s31, 1
          %s99 = smul.addr %s98, 36
          %s100 = scalar_lea.vmem [#allocation2], %s99
          %s101 = smul.addr %s15, 3
          %s102 = smul.addr %s14, 12
          %s103 = sadd.s32 %s101, %s102
          %s104 = smul.addr %s103, 4
          %s105 = scalar_lea.vmem %s0, %s104
          // Predicated region
          $region21: #{vit_forward.15} parent=19 // pred_check
            _
          $region22: #{vit_forward.15} parent=19 // pred_check_branch
            %107 = sbr.rel (0) target = $region24
          $region23: #{vit_forward.15} parent=19 // pred_region
            // Predicated region
            $region25: #{vit_forward.15} parent=23 // pred_check
              _
            $region26: #{vit_forward.15} parent=23 // pred_check_branch
              %109 = sbr.rel target = $region28
            $region27: #{vit_forward.15} parent=23 // pred_region
              // Predicated region
              $region40: #{vit_forward.15} parent=27 // pred_check
                _
              $region41: #{vit_forward.15} parent=27 // pred_check_branch
                %141 = sbr.rel (0) target = $region43
              $region42: #{vit_forward.15} parent=27 // pred_region
                loop: start=0, step=1, limit=1
                $region44: #{vit_forward.15} parent=42 // loop_pre_header
                  _
                $region45: #{vit_forward.15} parent=42 // loop_header
                  %s143 = sphi 0, %s147
                  %p144 = scmp.ge.s32.totalorder %s143, 1
                  %s148 = sphi %s105, %s105
                  %s149 = sphi %s100, %s100
                $region46: #{vit_forward.15} parent=42 // loop_header_branch
                  %146 = sbr.rel (%p144) target = $region50
                $region47: #{vit_forward.15} parent=42 // loop_body
                  _
                $region48: #{vit_forward.15} parent=42 // loop_footer
                  %s147 = sadd.s32 1, %s143
                $region49: #{vit_forward.15} parent=42 // loop_footer_branch
                  %142 = sbr.rel target = $region45
                $region50: #{vit_forward.15} parent=42 // loop_exit
                  _
                %s151 = ssub.s32 16, 1
                loop: start=0, step=1, limit=1
                $region51: #{vit_forward.15} parent=42 // loop_pre_header
                  _
                $region52: #{vit_forward.15} parent=42 // loop_header
                  %s153 = sphi 0, %s157
                  %p154 = scmp.ge.s32.totalorder %s153, 1
                  %s158 = sphi %s105, %s105
                  %s159 = sphi %s100, %s100
                $region53: #{vit_forward.15} parent=42 // loop_header_branch
                  %156 = sbr.rel (%p154) target = $region57
                $region54: #{vit_forward.15} parent=42 // loop_body
                  %v160 = vld [vmem:[%s158] sm:%s151]
                  %161 = vst [vmem:[%s159] sm:%s151] %v160
                  %v162 = vld [vmem:[%s158 + $0x4] sm:%s151]
                  %163 = vst [vmem:[%s159 + $0x4] sm:%s151] %v162
                  %v164 = vld [vmem:[%s158 + $0x8] sm:%s151]
                  %165 = vst [vmem:[%s159 + $0x8] sm:%s151] %v164
                  %v166 = vld [vmem:[%s158 + $0x60] sm:%s151]
                  %167 = vst [vmem:[%s159 + $0xc] sm:%s151] %v166
                  %v168 = vld [vmem:[%s158 + $0x64] sm:%s151]
                  %169 = vst [vmem:[%s159 + $0x10] sm:%s151] %v168
                  %v170 = vld [vmem:[%s158 + $0x68] sm:%s151]
                  %171 = vst [vmem:[%s159 + $0x14] sm:%s151] %v170
                  %v172 = vld [vmem:[%s158 + $0xc0] sm:%s151]
                  %173 = vst [vmem:[%s159 + $0x18] sm:%s151] %v172
                  %v174 = vld [vmem:[%s158 + $0xc4] sm:%s151]
                  %175 = vst [vmem:[%s159 + $0x1c] sm:%s151] %v174
                  %v176 = vld [vmem:[%s158 + $0xc8] sm:%s151]
                  %177 = vst [vmem:[%s159 + $0x20] sm:%s151] %v176
                $region55: #{vit_forward.15} parent=42 // loop_footer
                  %s157 = sadd.s32 1, %s153
                $region56: #{vit_forward.15} parent=42 // loop_footer_branch
                  %152 = sbr.rel target = $region52
                $region57: #{vit_forward.15} parent=42 // loop_exit
                  _
              $region43: #{vit_forward.15} parent=27 // pred_fallthru
                _
            $region28: #{vit_forward.15} parent=23 // pred_fallthru
              _
            // Predicated region
            $region29: #{vit_forward.15} parent=23 // pred_check
              _
            $region30: #{vit_forward.15} parent=23 // pred_check_branch
              %111 = sbr.rel (0) target = $region32
            $region31: #{vit_forward.15} parent=23 // pred_region
              %s113 = ssub.s32 16, 1
              loop: start=0, step=1, limit=1
              $region33: #{vit_forward.15} parent=31 // loop_pre_header
                _
              $region34: #{vit_forward.15} parent=31 // loop_header
                %s115 = sphi 0, %s119
                %p116 = scmp.ge.s32.totalorder %s115, 1
                %s120 = sphi %s105, %s105
                %s121 = sphi %s100, %s100
              $region35: #{vit_forward.15} parent=31 // loop_header_branch
                %118 = sbr.rel (%p116) target = $region39
              $region36: #{vit_forward.15} parent=31 // loop_body
                %v122 = vld [vmem:[%s120] sm:%s113]
                %123 = vst [vmem:[%s121] sm:%s113] %v122
                %v124 = vld [vmem:[%s120 + $0x4] sm:%s113]
                %125 = vst [vmem:[%s121 + $0x4] sm:%s113] %v124
                %v126 = vld [vmem:[%s120 + $0x8] sm:%s113]
                %127 = vst [vmem:[%s121 + $0x8] sm:%s113] %v126
                %v128 = vld [vmem:[%s120 + $0x60] sm:%s113]
                %129 = vst [vmem:[%s121 + $0xc] sm:%s113] %v128
                %v130 = vld [vmem:[%s120 + $0x64] sm:%s113]
                %131 = vst [vmem:[%s121 + $0x10] sm:%s113] %v130
                %v132 = vld [vmem:[%s120 + $0x68] sm:%s113]
                %133 = vst [vmem:[%s121 + $0x14] sm:%s113] %v132
                %v134 = vld [vmem:[%s120 + $0xc0] sm:%s113]
                %135 = vst [vmem:[%s121 + $0x18] sm:%s113] %v134
                %v136 = vld [vmem:[%s120 + $0xc4] sm:%s113]
                %137 = vst [vmem:[%s121 + $0x1c] sm:%s113] %v136
                %v138 = vld [vmem:[%s120 + $0xc8] sm:%s113]
                %139 = vst [vmem:[%s121 + $0x20] sm:%s113] %v138
              $region37: #{vit_forward.15} parent=31 // loop_footer
                %s119 = sadd.s32 1, %s115
              $region38: #{vit_forward.15} parent=31 // loop_footer_branch
                %114 = sbr.rel target = $region34
              $region39: #{vit_forward.15} parent=31 // loop_exit
                _
            $region32: #{vit_forward.15} parent=23 // pred_fallthru
              _
          $region24: #{vit_forward.15} parent=19 // pred_fallthru
            _
          %178 = vnop
        $region20: #{vit_forward.15} parent=15 // pred_fallthru
          _
      $region16: #{vit_forward.15} parent=5 // pred_fallthru
        _
      %p179 = scmp.le.s32.totalorder 1, %s7
      %p180 = scmp.lt.s32.totalorder %s7, 9
      %p181 = pnand %p179, %p180
      %p182 = pneg %p181
      // Predicated region
      $region58: #{vit_forward.15} parent=5 // pred_check
        _
      $region59: #{vit_forward.15} parent=5 // pred_check_branch
        %184 = sbr.rel (%p181) target = $region61
      $region60: #{vit_forward.15} parent=5 // pred_region
        %s185 = ssub.s32 %s7, 1
        %s186 = sand.u32 %s34, 1
        %s187 = sand.u32 %s34, 1
        %s188 = smul.addr %s187, 36
        %s189 = scalar_lea.vmem [#allocation2], %s188
        // Predicated region
        $region62: #{vit_forward.15} parent=60 // pred_check
          %p190 = pneg %p47
        $region63: #{vit_forward.15} parent=60 // pred_check_branch
          %192 = sbr.rel (%p190) target = $region65
        $region64: #{vit_forward.15} parent=60 // pred_region
          _
        $region65: #{vit_forward.15} parent=60 // pred_fallthru
          _
        %s193 = sand.u32 %s34, 1
        %s194 = sand.u32 %s34, 1
        %s195 = smul.addr %s194, 36
        %s196 = scalar_lea.vmem [#allocation2], %s195
        %p197 = pneg %p47
        %p198 = pneg %p44
        %p199 = pneg %p75
        %p200 = pneg %p72
        %p201 = scmp.lt.s32.totalorder %s16, 1
        %s202 = scalar_select %p201, %s16, 1
        %p203 = scmp.lt.s32.totalorder %s17, 3
        %s204 = scalar_select %p203, %s17, 3
        %s205 = smul.addr %s204, 3
        %s206 = smul.addr %s202, 12
        %s207 = sadd.s32 %s205, %s206
        %s208 = smul.addr %s207, 4
        %s209 = scalar_lea.vmem %s1, %s208
        %p210 = scmp.lt.s32.totalorder %s16, 1
        %s211 = scalar_select %p210, %s16, 1
        %p212 = scmp.lt.s32.totalorder %s17, 3
        %s213 = scalar_select %p212, %s17, 3
        %s214 = smul.addr %s213, 3
        %s215 = smul.addr %s211, 12
        %s216 = sadd.s32 %s214, %s215
        %s217 = smul.addr %s216, 4
        %s218 = scalar_lea.vmem %s1, %s217
        %v220 = vld [vmem:[%s189] sm:$0xf]
        %v221 = vld [vmem:[%s189 + $0x4] sm:$0xf]
        %v222 = vld [vmem:[%s189 + $0x8] sm:$0xf]
        %s223 = scalar_lea.vmem %s189, 12 [#allocation2]
        %v224 = vld [vmem:[%s223] sm:$0xf]
        %v225 = vld [vmem:[%s223 + $0x4] sm:$0xf]
        %v226 = vld [vmem:[%s223 + $0x8] sm:$0xf]
        %s227 = scalar_lea.vmem %s189, 24 [#allocation2]
        %v228 = vld [vmem:[%s227] sm:$0xf]
        %v229 = vld [vmem:[%s227 + $0x4] sm:$0xf]
        %v230 = vld [vmem:[%s227 + $0x8] sm:$0xf]
        %v234 = vunpack.c.l.b16 %v220
        %v235 = vunpack.c.l.b16 %v221
        %v236 = vunpack.c.l.b16 %v222
        %v237 = vpack.c.b16 %v235, %v234
        %v238 = vpack.c.b16 %v236, %v236
        %v242 = vunpack.c.l.b16 %v224
        %v243 = vunpack.c.l.b16 %v225
        %v244 = vunpack.c.l.b16 %v226
        %v245 = vpack.c.b16 %v243, %v242
        %v246 = vpack.c.b16 %v244, %v244
        %vm247 = vcmask 64512
        %v249 = vsel %vm247, %v237, 0
        %v252 = vsel %vm247, %v238, 0
        %v255 = vsel %vm247, %v245, 0
        %v258 = vsel %vm247, %v246, 0
        %260 = vmatpush.bf16.xpose.msra.mxu0 0
        %261 = vmatpush.bf16.xpose.msra.mxu0 0
        %262 = vmatpush.bf16.xpose.msra.mxu0 0
        %263 = vmatpush.bf16.xpose.msra.mxu0 0
        %264 = vmatpush.bf16.xpose.msra.mxu0 0
        %265 = vmatpush.bf16.xpose.msra.mxu0 0
        %266 = vmatpush.bf16.xpose.msra.mxu0 %v258
        %267 = vmatpush.bf16.xpose.msra.mxu0 %v255
        %268 = vmatmul.bf16.gmra.mxu0 %v249
        %v269 = vpop.f32.mrf.mxu0
        %v270 = vadd.f32 0.0, %v269
        %v271 = vpop.f32.mrf.mxu0
        %v272 = vadd.f32 0.0, %v271
        %273 = vmatmul.bf16.gmra.mxu0 %v252
        %v274 = vpop.f32.mrf.mxu0
        %v275 = vadd.f32 0.0, %v274
        %v276 = vpop.f32.mrf.mxu0
        %277 = vdwg.mxu0
        %v278 = vmul.f32 %v270, 0.35355338
        %v279 = vmul.f32 %v272, 0.35355338
        %v280 = vmul.f32 %v275, 0.35355338
        %v281 = vlaneseq
        %v282 = vand.u32 %v281, 127
        %vm283 = vcmp.lt.s32.totalorder %v282, 17
        %v284 = vsel %vm283, %v278, -1e+30
        %v285 = vsel %vm283, %v279, -1e+30
        %v286 = vsel %vm283, %v280, -1e+30
        %vm287 = vcmask 195584
        %v288 = vsel %vm287, %v284, -inf
        %289 = vmax.xlane.f32.xlu0 %v288
        %v290 = vpop.xlane.xlu0 %289
        %v291 = vsel %vm287, %v285, -inf
        %292 = vmax.xlane.f32.xlu0 %v291
        %v293 = vpop.xlane.xlu0 %292
        %v294 = vsel %vm287, %v286, -inf
        %295 = vmax.xlane.f32.xlu0 %v294
        %v296 = vpop.xlane.xlu0 %295
        %v297 = vsub.f32 %v284, %v290
        %v298 = vsub.f32 %v285, %v293
        %v299 = vsub.f32 %v286, %v296
        %v300 = vmul.f32 %v297, 1.442695
        %v301 = vpow.pop %v300
        %v302 = vmul.f32 %v298, 1.442695
        %v303 = vpow.pop %v302
        %v304 = vmul.f32 %v299, 1.442695
        %v305 = vpow.pop %v304
        %v306 = vsel %vm287, %v301, 0.0
        %307 = vadd.xlane.f32.xlu0 %v306
        %v308 = vpop.xlane.xlu0 %307
        %v309 = vsel %vm287, %v303, 0.0
        %310 = vadd.xlane.f32.xlu0 %v309
        %v311 = vpop.xlane.xlu0 %310
        %v312 = vsel %vm287, %v305, 0.0
        %313 = vadd.xlane.f32.xlu0 %v312
        %v314 = vpop.xlane.xlu0 %313
        %v315 = vrcp.pop %v308
        %v316 = vmul.f32 %v308, %v315
        %v317 = vsub.f32 1.0, %v316
        %v318 = vmul.f32 %v315, %v317
        %v319 = vadd.f32 %v315, %v318
        %vm320 = vweird.f32 %v308
        %vm321 = vweird.f32 %v315
        %vm322 = vmor %vm320, %vm321
        %v323 = vsel %vm322, %v315, %v319
        %v324 = vand.u32 2147483647, %v308
        %vm325 = vcmp.eq.f32.partialorder %v324, 8.507059e+37
        %v326 = vand.u32 %v308, 2147483648
        %v327 = vor.u32 1.1754944e-38, %v326
        %v328 = vsel %vm325, %v327, %v323
        %v329 = vmul.f32 1.0, %v328
        %v330 = vrcp.pop %v311
        %v331 = vmul.f32 %v311, %v330
        %v332 = vsub.f32 1.0, %v331
        %v333 = vmul.f32 %v330, %v332
        %v334 = vadd.f32 %v330, %v333
        %vm335 = vweird.f32 %v311
        %vm336 = vweird.f32 %v330
        %vm337 = vmor %vm335, %vm336
        %v338 = vsel %vm337, %v330, %v334
        %v339 = vand.u32 2147483647, %v311
        %vm340 = vcmp.eq.f32.partialorder %v339, 8.507059e+37
        %v341 = vand.u32 %v311, 2147483648
        %v342 = vor.u32 1.1754944e-38, %v341
        %v343 = vsel %vm340, %v342, %v338
        %v344 = vmul.f32 1.0, %v343
        %v345 = vrcp.pop %v314
        %v346 = vmul.f32 %v314, %v345
        %v347 = vsub.f32 1.0, %v346
        %v348 = vmul.f32 %v345, %v347
        %v349 = vadd.f32 %v345, %v348
        %vm350 = vweird.f32 %v314
        %vm351 = vweird.f32 %v345
        %vm352 = vmor %vm350, %vm351
        %v353 = vsel %vm352, %v345, %v349
        %v354 = vand.u32 2147483647, %v314
        %vm355 = vcmp.eq.f32.partialorder %v354, 8.507059e+37
        %v356 = vand.u32 %v314, 2147483648
        %v357 = vor.u32 1.1754944e-38, %v356
        %v358 = vsel %vm355, %v357, %v353
        %v359 = vmul.f32 1.0, %v358
        %v360 = vmul.f32 %v301, %v329
        %v361 = vmul.f32 %v303, %v344
        %v362 = vmul.f32 %v305, %v359
        %v363 = vpack.c.bf16 %v361, %v360
        %v364 = vpack.c.bf16 %v362, %v362
        %v368 = vunpack.c.l.b16 %v228
        %v369 = vunpack.c.l.b16 %v229
        %v370 = vunpack.c.l.b16 %v230
        %v371 = vpack.c.b16 %v369, %v368
        %v372 = vpack.c.b16 %v370, %v370
        %v375 = vsel %vm287, %v363, 0
        %v378 = vsel %vm287, %v364, 0
        %vm380 = vcmask 1043456
        %v382 = vsel %vm380, %v372, 0
        %384 = vmatpush.bf16.msra.mxu0 0
        %385 = vmatpush.bf16.msra.mxu0 0
        %386 = vmatpush.bf16.msra.mxu0 0
        %387 = vmatpush.bf16.msra.mxu0 0
        %388 = vmatpush.bf16.msra.mxu0 0
        %389 = vmatpush.bf16.msra.mxu0 0
        %390 = vmatpush.bf16.msra.mxu0 %v382
        %391 = vmatpush.bf16.msra.mxu0 %v371
        %392 = vmatmul.bf16.gmra.mxu0 %v375
        %v393 = vpop.f32.mrf.mxu0
        %v394 = vadd.f32 0.0, %v393
        %v395 = vpop.f32.mrf.mxu0
        %v396 = vadd.f32 0.0, %v395
        %397 = vmatmul.bf16.gmra.mxu0 %v378
        %v398 = vpop.f32.mrf.mxu0
        %v399 = vadd.f32 0.0, %v398
        %v400 = vpop.f32.mrf.mxu0
        %401 = vdwg.mxu0
        %v402 = vpack.c.bf16 %v394, %v394
        %v403 = vpack.c.bf16 %v396, %v396
        %v404 = vpack.c.bf16 %v399, %v399
        %vm405 = vcmask 60416
        %406 = vst.msk [vmem:[%s218] sm:$0xf] %vm405, %v402
        %407 = vst.msk [vmem:[%s218 + $0x4] sm:$0xf] %vm405, %v403
        %408 = vst.msk [vmem:[%s218 + $0x8] sm:$0xf] %vm405, %v404
        %p409 = scmp.lt.s32.totalorder %s16, 1
        %s410 = scalar_select %p409, %s16, 1
        %p411 = scmp.lt.s32.totalorder %s17, 3
        %s412 = scalar_select %p411, %s17, 3
        %s413 = smul.addr %s412, 3
        %s414 = smul.addr %s410, 12
        %s415 = sadd.s32 %s413, %s414
        %s416 = smul.addr %s415, 4
        %s417 = scalar_lea.vmem %s1, %s416
        // Predicated region
        $region66: #{vit_forward.15} parent=60 // pred_check
          %p418 = pneg %p72
        $region67: #{vit_forward.15} parent=60 // pred_check_branch
          %420 = sbr.rel (%p418) target = $region69
        $region68: #{vit_forward.15} parent=60 // pred_region
          _
        $region69: #{vit_forward.15} parent=60 // pred_fallthru
          _
      $region61: #{vit_forward.15} parent=5 // pred_fallthru
        _
      %p421 = scmp.le.s32.totalorder 2, %s7
      // Predicated region
      $region70: #{vit_forward.15} parent=5 // pred_check
        %p422 = pneg %p421
      $region71: #{vit_forward.15} parent=5 // pred_check_branch
        %424 = sbr.rel (%p422) target = $region73
      $region72: #{vit_forward.15} parent=5 // pred_region
        %s425 = ssub.s32 %s7, 2
        // Predicated region
        $region74: #{vit_forward.15} parent=72 // pred_check
          %p426 = pneg %p78
        $region75: #{vit_forward.15} parent=72 // pred_check_branch
          %428 = sbr.rel (%p426) target = $region77
        $region76: #{vit_forward.15} parent=72 // pred_region
          %p429 = scmp.lt.s32.totalorder %s18, 1
          %s430 = scalar_select %p429, %s18, 1
          %p431 = scmp.lt.s32.totalorder %s19, 3
          %s432 = scalar_select %p431, %s19, 3
          %s433 = smul.addr %s432, 3
          %s434 = smul.addr %s430, 12
          %s435 = sadd.s32 %s433, %s434
          %s436 = smul.addr %s435, 4
          %s437 = scalar_lea.vmem %s1, %s436
        $region77: #{vit_forward.15} parent=72 // pred_fallthru
          _
      $region73: #{vit_forward.15} parent=5 // pred_fallthru
        _
    $region6: #{vit_forward.15} parent=1 // loop_footer
      %s11 = sadd.s32 1, %s7
    $region7: #{vit_forward.15} parent=1 // loop_footer_branch
      %6 = sbr.rel target = $region3
    $region8: #{vit_forward.15} parent=1 // loop_exit
      _

// kernel: vit_forward.17
$region0: #{vit_forward.17}
  #allocation0 [shape = 'u32[]', space=smem, size = 0x4, offset = 0x4, fixed_abs, tag = 'smem constant byte address 0x4 - core index']
  #allocation1 [shape = 'u32[72,128]{1,0:T(1,128)}', space=vmem, size = 0x9000, scoped, tag = 'internal scratch']
  %s0 = inlined_call_operand.vmem [shape: bf16[48,32], index: 0, kind: input, shape index: {}]
  %s1 = inlined_call_operand.vmem [shape: bf16[32,64], index: 1, kind: input, shape index: {}]
  %s2 = inlined_call_operand.vmem [shape: f32[1,64], index: 2, kind: input, shape index: {}]
  %s3 = inlined_call_operand.vmem [shape: bf16[48,64], index: 3, kind: output, shape index: {}]
  %s4 = sld [smem:[#allocation0]]
  $region22: #{vit_forward.17} parent=0
    _
  %s6 = ssub.s32 1, %s4
  %s7 = scalar_select 0, %s6, %s4
  // Predicated region
  $region2: #{vit_forward.17} parent=0 // pred_check
    _
  $region3: #{vit_forward.17} parent=0 // pred_check_branch
    %9 = sbr.rel (0) target = $region5
  $region4: #{vit_forward.17} parent=0 // pred_region
    _
  $region5: #{vit_forward.17} parent=0 // pred_fallthru
    _
  // Predicated region
  $region6: #{vit_forward.17} parent=0 // pred_check
    _
  $region7: #{vit_forward.17} parent=0 // pred_check_branch
    %11 = sbr.rel (0) target = $region9
  $region8: #{vit_forward.17} parent=0 // pred_region
    _
  $region9: #{vit_forward.17} parent=0 // pred_fallthru
    _
  // Predicated region
  $region10: #{vit_forward.17} parent=0 // pred_check
    _
  $region11: #{vit_forward.17} parent=0 // pred_check_branch
    %13 = sbr.rel (0) target = $region13
  $region12: #{vit_forward.17} parent=0 // pred_region
    _
  $region13: #{vit_forward.17} parent=0 // pred_fallthru
    _
  %v15 = vld [vmem:[%s0] sm:$0xf]
  %v16 = vld [vmem:[%s0 + $0x4] sm:$0xf]
  %v17 = vld [vmem:[%s0 + $0x8] sm:$0xf]
  %v18 = vld [vmem:[%s0 + $0xc] sm:$0xf]
  %v19 = vld [vmem:[%s0 + $0x10] sm:$0xf]
  %v20 = vld [vmem:[%s0 + $0x14] sm:$0xf]
  %v21 = vld [vmem:[%s1] sm:$0xf]
  %v22 = vld [vmem:[%s1 + $0x4] sm:$0xf]
  %v23 = vld [vmem:[%s1 + $0x8] sm:$0xf]
  %v24 = vld [vmem:[%s1 + $0xc] sm:$0xf]
  %v25 = vld [vmem:[%s2] sm:$0x1]
  %v27 = vperm.slane %v25, 0
  %v35 = vunpack.c.l.b16 %v15
  %v36 = vunpack.c.l.b16 %v16
  %v37 = vunpack.c.l.b16 %v17
  %v38 = vunpack.c.l.b16 %v18
  %v39 = vunpack.c.l.b16 %v19
  %v40 = vunpack.c.l.b16 %v20
  %v41 = vpack.c.b16 %v36, %v35
  %v42 = vpack.c.b16 %v38, %v37
  %v43 = vpack.c.b16 %v40, %v39
  %v48 = vunpack.c.l.b16 %v21
  %v49 = vunpack.c.l.b16 %v22
  %v50 = vunpack.c.l.b16 %v23
  %v51 = vunpack.c.l.b16 %v24
  %v52 = vpack.c.b16 %v49, %v48
  %v53 = vpack.c.b16 %v51, %v50
  %vm56 = vcmask 261120
  %v58 = vsel %vm56, %v41, 0
  %v61 = vsel %vm56, %v42, 0
  %v64 = vsel %vm56, %v43, 0
  %66 = vmatpush.bf16.msra.mxu0 0
  %67 = vmatpush.bf16.msra.mxu0 0
  %68 = vmatpush.bf16.msra.mxu0 0
  %69 = vmatpush.bf16.msra.mxu0 0
  %70 = vmatpush.bf16.msra.mxu0 0
  %71 = vmatpush.bf16.msra.mxu0 0
  %72 = vmatpush.bf16.msra.mxu0 %v53
  %73 = vmatpush.bf16.msra.mxu0 %v52
  %74 = vmatmul.bf16.gmra.mxu0 %v58
  %v75 = vpop.f32.mrf.mxu0
  %v76 = vadd.f32 %v27, %v75
  %v77 = vpop.f32.mrf.mxu0
  %v78 = vadd.f32 %v27, %v77
  %79 = vmatmul.bf16.gmra.mxu0 %v61
  %v80 = vpop.f32.mrf.mxu0
  %v81 = vadd.f32 %v27, %v80
  %v82 = vpop.f32.mrf.mxu0
  %v83 = vadd.f32 %v27, %v82
  %84 = vmatmul.bf16.gmra.mxu0 %v64
  %v85 = vpop.f32.mrf.mxu0
  %v86 = vadd.f32 %v27, %v85
  %v87 = vpop.f32.mrf.mxu0
  %v88 = vadd.f32 %v27, %v87
  %89 = vdwg.mxu0
  %v90 = vmul.f32 %v76, 0.5
  %v91 = vmul.f32 %v78, 0.5
  %v92 = vmul.f32 %v81, 0.5
  %v93 = vmul.f32 %v83, 0.5
  %v94 = vmul.f32 %v86, 0.5
  %v95 = vmul.f32 %v88, 0.5
  %v96 = vmul.f32 %v76, %v76
  %v97 = vmul.f32 %v78, %v78
  %v98 = vmul.f32 %v81, %v81
  %v99 = vmul.f32 %v83, %v83
  %v100 = vmul.f32 %v86, %v86
  %v101 = vmul.f32 %v88, %v88
  %v102 = vmul.f32 %v96, %v76
  %v103 = vmul.f32 %v97, %v78
  %v104 = vmul.f32 %v98, %v81
  %v105 = vmul.f32 %v99, %v83
  %v106 = vmul.f32 %v100, %v86
  %v107 = vmul.f32 %v101, %v88
  %v108 = vmul.f32 %v102, 0.044715
  %v109 = vmul.f32 %v103, 0.044715
  %v110 = vmul.f32 %v104, 0.044715
  %v111 = vmul.f32 %v105, 0.044715
  %v112 = vmul.f32 %v106, 0.044715
  %v113 = vmul.f32 %v107, 0.044715
  %v114 = vadd.f32 %v76, %v108
  %v115 = vadd.f32 %v78, %v109
  %v116 = vadd.f32 %v81, %v110
  %v117 = vadd.f32 %v83, %v111
  %v118 = vadd.f32 %v86, %v112
  %v119 = vadd.f32 %v88, %v113
  %v120 = vmul.f32 %v114, 0.7978846
  %v121 = vmul.f32 %v115, 0.7978846
  %v122 = vmul.f32 %v116, 0.7978846
  %v123 = vmul.f32 %v117, 0.7978846
  %v124 = vmul.f32 %v118, 0.7978846
  %v125 = vmul.f32 %v119, 0.7978846
  %v126 = vtanh.pop %v120
  %v127 = vtanh.pop %v121
  %v128 = vtanh.pop %v122
  %v129 = vtanh.pop %v123
  %v130 = vtanh.pop %v124
  %v131 = vtanh.pop %v125
  %v132 = vadd.f32 %v126, 1.0
  %v133 = vadd.f32 %v127, 1.0
  %v134 = vadd.f32 %v128, 1.0
  %v135 = vadd.f32 %v129, 1.0
  %v136 = vadd.f32 %v130, 1.0
  %v137 = vadd.f32 %v131, 1.0
  %v138 = vmul.f32 %v90, %v132
  %v139 = vmul.f32 %v91, %v133
  %v140 = vmul.f32 %v92, %v134
  %v141 = vmul.f32 %v93, %v135
  %v142 = vmul.f32 %v94, %v136
  %v143 = vmul.f32 %v95, %v137
  %v144 = vpack.c.bf16 %v138, %v138
  %v145 = vpack.c.bf16 %v139, %v139
  %v146 = vpack.c.bf16 %v140, %v140
  %v147 = vpack.c.bf16 %v141, %v141
  %v148 = vpack.c.bf16 %v142, %v142
  %v149 = vpack.c.bf16 %v143, %v143
  %vm150 = vcmask 519168
  %151 = vst.msk [vmem:[%s3] sm:$0xf] %vm150, %v144
  %152 = vst.msk [vmem:[%s3 + $0x4] sm:$0xf] %vm150, %v145
  %153 = vst.msk [vmem:[%s3 + $0x8] sm:$0xf] %vm150, %v146
  %154 = vst.msk [vmem:[%s3 + $0xc] sm:$0xf] %vm150, %v147
  %155 = vst.msk [vmem:[%s3 + $0x10] sm:$0xf] %vm150, %v148
  %156 = vst.msk [vmem:[%s3 + $0x14] sm:$0xf] %vm150, %v149
  // Predicated region
  $region14: #{vit_forward.17} parent=0 // pred_check
    _
  $region15: #{vit_forward.17} parent=0 // pred_check_branch
    %158 = sbr.rel (0) target = $region17
  $region16: #{vit_forward.17} parent=0 // pred_region
    _
  $region17: #{vit_forward.17} parent=0 // pred_fallthru
    _
  // Predicated region
  $region18: #{vit_forward.17} parent=0 // pred_check
    _
  $region19: #{vit_forward.17} parent=0 // pred_check_branch
    %160 = sbr.rel (0) target = $region21
  $region20: #{vit_forward.17} parent=0 // pred_region
    _
  $region21: #{vit_forward.17} parent=0 // pred_fallthru
    _

// kernel: vit_forward.16
$region0: #{vit_forward.16}
  #allocation0 [shape = 'u32[]', space=smem, size = 0x4, offset = 0x4, fixed_abs, tag = 'smem constant byte address 0x4 - core index']
  #allocation1 [shape = 'u32[72,128]{1,0:T(1,128)}', space=vmem, size = 0x9000, scoped, tag = 'internal scratch']
  %s0 = inlined_call_operand.vmem [shape: bf16[48,32], index: 0, kind: input, shape index: {}]
  %s1 = inlined_call_operand.vmem [shape: bf16[32,32], index: 1, kind: input, shape index: {}]
  %s2 = inlined_call_operand.vmem [shape: f32[1,32], index: 2, kind: input, shape index: {}]
  %s3 = inlined_call_operand.vmem [shape: bf16[48,32], index: 3, kind: input, shape index: {}]
  %s4 = inlined_call_operand.vmem [shape: f32[1,32], index: 4, kind: input, shape index: {}]
  %s5 = inlined_call_operand.vmem [shape: f32[1,32], index: 5, kind: input, shape index: {}]
  %s6 = inlined_call_operand.vmem [shape: bf16[48,32], index: 6, kind: output, shape index: {}]
  %s7 = sld [smem:[#allocation0]]
  $region34: #{vit_forward.16} parent=0
    _
  %s9 = ssub.s32 1, %s7
  %s10 = scalar_select 0, %s9, %s7
  // Predicated region
  $region2: #{vit_forward.16} parent=0 // pred_check
    _
  $region3: #{vit_forward.16} parent=0 // pred_check_branch
    %12 = sbr.rel (0) target = $region5
  $region4: #{vit_forward.16} parent=0 // pred_region
    _
  $region5: #{vit_forward.16} parent=0 // pred_fallthru
    _
  // Predicated region
  $region6: #{vit_forward.16} parent=0 // pred_check
    _
  $region7: #{vit_forward.16} parent=0 // pred_check_branch
    %14 = sbr.rel (0) target = $region9
  $region8: #{vit_forward.16} parent=0 // pred_region
    _
  $region9: #{vit_forward.16} parent=0 // pred_fallthru
    _
  // Predicated region
  $region10: #{vit_forward.16} parent=0 // pred_check
    _
  $region11: #{vit_forward.16} parent=0 // pred_check_branch
    %16 = sbr.rel (0) target = $region13
  $region12: #{vit_forward.16} parent=0 // pred_region
    _
  $region13: #{vit_forward.16} parent=0 // pred_fallthru
    _
  // Predicated region
  $region14: #{vit_forward.16} parent=0 // pred_check
    _
  $region15: #{vit_forward.16} parent=0 // pred_check_branch
    %18 = sbr.rel (0) target = $region17
  $region16: #{vit_forward.16} parent=0 // pred_region
    _
  $region17: #{vit_forward.16} parent=0 // pred_fallthru
    _
  // Predicated region
  $region18: #{vit_forward.16} parent=0 // pred_check
    _
  $region19: #{vit_forward.16} parent=0 // pred_check_branch
    %20 = sbr.rel (0) target = $region21
  $region20: #{vit_forward.16} parent=0 // pred_region
    _
  $region21: #{vit_forward.16} parent=0 // pred_fallthru
    _
  // Predicated region
  $region22: #{vit_forward.16} parent=0 // pred_check
    _
  $region23: #{vit_forward.16} parent=0 // pred_check_branch
    %22 = sbr.rel (0) target = $region25
  $region24: #{vit_forward.16} parent=0 // pred_region
    _
  $region25: #{vit_forward.16} parent=0 // pred_fallthru
    _
  %v24 = vld [vmem:[%s0] sm:$0xf]
  %v25 = vld [vmem:[%s0 + $0x4] sm:$0xf]
  %v26 = vld [vmem:[%s0 + $0x8] sm:$0xf]
  %v27 = vld [vmem:[%s0 + $0xc] sm:$0xf]
  %v28 = vld [vmem:[%s0 + $0x10] sm:$0xf]
  %v29 = vld [vmem:[%s0 + $0x14] sm:$0xf]
  %v30 = vld [vmem:[%s1] sm:$0xf]
  %v31 = vld [vmem:[%s1 + $0x4] sm:$0xf]
  %v32 = vld [vmem:[%s1 + $0x8] sm:$0xf]
  %v33 = vld [vmem:[%s1 + $0xc] sm:$0xf]
  %v34 = vld [vmem:[%s2] sm:$0x1]
  %v36 = vperm.slane %v34, 0
  %v44 = vunpack.c.l.b16 %v24
  %v45 = vunpack.c.l.b16 %v25
  %v46 = vunpack.c.l.b16 %v26
  %v47 = vunpack.c.l.b16 %v27
  %v48 = vunpack.c.l.b16 %v28
  %v49 = vunpack.c.l.b16 %v29
  %v50 = vpack.c.b16 %v45, %v44
  %v51 = vpack.c.b16 %v47, %v46
  %v52 = vpack.c.b16 %v49, %v48
  %v57 = vunpack.c.l.b16 %v30
  %v58 = vunpack.c.l.b16 %v31
  %v59 = vunpack.c.l.b16 %v32
  %v60 = vunpack.c.l.b16 %v33
  %v61 = vpack.c.b16 %v58, %v57
  %v62 = vpack.c.b16 %v60, %v59
  %vm65 = vcmask 261120
  %v67 = vsel %vm65, %v50, 0
  %v70 = vsel %vm65, %v51, 0
  %v73 = vsel %vm65, %v52, 0
  %75 = vmatpush.bf16.msra.mxu0 0
  %76 = vmatpush.bf16.msra.mxu0 0
  %77 = vmatpush.bf16.msra.mxu0 0
  %78 = vmatpush.bf16.msra.mxu0 0
  %79 = vmatpush.bf16.msra.mxu0 0
  %80 = vmatpush.bf16.msra.mxu0 0
  %81 = vmatpush.bf16.msra.mxu0 %v62
  %82 = vmatpush.bf16.msra.mxu0 %v61
  %83 = vmatmul.bf16.gmra.mxu0 %v67
  %v84 = vpop.f32.mrf.mxu0
  %v85 = vadd.f32 %v36, %v84
  %v86 = vpop.f32.mrf.mxu0
  %v87 = vadd.f32 %v36, %v86
  %88 = vmatmul.bf16.gmra.mxu0 %v70
  %v89 = vpop.f32.mrf.mxu0
  %v90 = vadd.f32 %v36, %v89
  %v91 = vpop.f32.mrf.mxu0
  %v92 = vadd.f32 %v36, %v91
  %93 = vmatmul.bf16.gmra.mxu0 %v73
  %v94 = vpop.f32.mrf.mxu0
  %v95 = vadd.f32 %v36, %v94
  %v96 = vpop.f32.mrf.mxu0
  %v97 = vadd.f32 %v36, %v96
  %98 = vdwg.mxu0
  %v99 = vld [vmem:[%s3] sm:$0xf]
  %v100 = vld [vmem:[%s3 + $0x4] sm:$0xf]
  %v101 = vld [vmem:[%s3 + $0x8] sm:$0xf]
  %v102 = vld [vmem:[%s3 + $0xc] sm:$0xf]
  %v103 = vld [vmem:[%s3 + $0x10] sm:$0xf]
  %v104 = vld [vmem:[%s3 + $0x14] sm:$0xf]
  %v105 = vunpack.c.l.bf16 %v99
  %v106 = vunpack.c.l.bf16 %v100
  %v107 = vunpack.c.l.bf16 %v101
  %v108 = vunpack.c.l.bf16 %v102
  %v109 = vunpack.c.l.bf16 %v103
  %v110 = vunpack.c.l.bf16 %v104
  %v111 = vadd.f32 %v85, %v105
  %v112 = vadd.f32 %v87, %v106
  %v113 = vadd.f32 %v90, %v107
  %v114 = vadd.f32 %v92, %v108
  %v115 = vadd.f32 %v95, %v109
  %v116 = vadd.f32 %v97, %v110
  %v117 = vsel %vm65, %v111, 0.0
  %118 = vadd.xlane.f32.xlu0 %v117
  %v119 = vpop.xlane.xlu0 %118
  %v120 = vsel %vm65, %v112, 0.0
  %121 = vadd.xlane.f32.xlu0 %v120
  %v122 = vpop.xlane.xlu0 %121
  %v123 = vsel %vm65, %v113, 0.0
  %124 = vadd.xlane.f32.xlu0 %v123
  %v125 = vpop.xlane.xlu0 %124
  %v126 = vsel %vm65, %v114, 0.0
  %127 = vadd.xlane.f32.xlu0 %v126
  %v128 = vpop.xlane.xlu0 %127
  %v129 = vsel %vm65, %v115, 0.0
  %130 = vadd.xlane.f32.xlu0 %v129
  %v131 = vpop.xlane.xlu0 %130
  %v132 = vsel %vm65, %v116, 0.0
  %133 = vadd.xlane.f32.xlu0 %v132
  %v134 = vpop.xlane.xlu0 %133
  %v135 = vrcp.pop 32.0
  %v136 = vmul.f32 32.0, %v135
  %v137 = vsub.f32 1.0, %v136
  %v138 = vmul.f32 %v135, %v137
  %v139 = vadd.f32 %v135, %v138
  %vm140 = vweird.f32 %v135
  %v141 = vsel %vm140, %v135, %v139
  %v142 = vmul.f32 %v119, %v141
  %v143 = vmul.f32 %v122, %v141
  %v144 = vmul.f32 %v125, %v141
  %v145 = vmul.f32 %v128, %v141
  %v146 = vmul.f32 %v131, %v141
  %v147 = vmul.f32 %v134, %v141
  %v148 = vsub.f32 %v111, %v142
  %v149 = vsub.f32 %v112, %v143
  %v150 = vsub.f32 %v113, %v144
  %v151 = vsub.f32 %v114, %v145
  %v152 = vsub.f32 %v115, %v146
  %v153 = vsub.f32 %v116, %v147
  %v154 = vmul.f32 %v148, %v148
  %v155 = vmul.f32 %v149, %v149
  %v156 = vmul.f32 %v150, %v150
  %v157 = vmul.f32 %v151, %v151
  %v158 = vmul.f32 %v152, %v152
  %v159 = vmul.f32 %v153, %v153
  %v160 = vsel %vm65, %v154, 0.0
  %161 = vadd.xlane.f32.xlu0 %v160
  %v162 = vpop.xlane.xlu0 %161
  %v163 = vsel %vm65, %v155, 0.0
  %164 = vadd.xlane.f32.xlu0 %v163
  %v165 = vpop.xlane.xlu0 %164
  %v166 = vsel %vm65, %v156, 0.0
  %167 = vadd.xlane.f32.xlu0 %v166
  %v168 = vpop.xlane.xlu0 %167
  %v169 = vsel %vm65, %v157, 0.0
  %170 = vadd.xlane.f32.xlu0 %v169
  %v171 = vpop.xlane.xlu0 %170
  %v172 = vsel %vm65, %v158, 0.0
  %173 = vadd.xlane.f32.xlu0 %v172
  %v174 = vpop.xlane.xlu0 %173
  %v175 = vsel %vm65, %v159, 0.0
  %176 = vadd.xlane.f32.xlu0 %v175
  %v177 = vpop.xlane.xlu0 %176
  %v178 = vmul.f32 %v162, %v141
  %v179 = vmul.f32 %v165, %v141
  %v180 = vmul.f32 %v168, %v141
  %v181 = vmul.f32 %v171, %v141
  %v182 = vmul.f32 %v174, %v141
  %v183 = vmul.f32 %v177, %v141
  %v184 = vadd.f32 %v178, 1e-05
  %v185 = vadd.f32 %v179, 1e-05
  %v186 = vadd.f32 %v180, 1e-05
  %v187 = vadd.f32 %v181, 1e-05
  %v188 = vadd.f32 %v182, 1e-05
  %v189 = vadd.f32 %v183, 1e-05
  %v190 = vrsqrt.pop %v184
  %v191 = vmul.f32 %v190, %v184
  %v192 = vmul.f32 %v191, %v190
  %v193 = vmul.f32 0.5, %v192
  %v194 = vsub.f32 1.5, %v193
  %v195 = vmul.f32 %v190, %v194
  %vm196 = vweird.f32 %v184
  %vm197 = vweird.f32 %v190
  %vm198 = vmor %vm196, %vm197
  %v199 = vsel %vm198, %v190, %v195
  %v200 = vrsqrt.pop %v185
  %v201 = vmul.f32 %v200, %v185
  %v202 = vmul.f32 %v201, %v200
  %v203 = vmul.f32 0.5, %v202
  %v204 = vsub.f32 1.5, %v203
  %v205 = vmul.f32 %v200, %v204
  %vm206 = vweird.f32 %v185
  %vm207 = vweird.f32 %v200
  %vm208 = vmor %vm206, %vm207
  %v209 = vsel %vm208, %v200, %v205
  %v210 = vrsqrt.pop %v186
  %v211 = vmul.f32 %v210, %v186
  %v212 = vmul.f32 %v211, %v210
  %v213 = vmul.f32 0.5, %v212
  %v214 = vsub.f32 1.5, %v213
  %v215 = vmul.f32 %v210, %v214
  %vm216 = vweird.f32 %v186
  %vm217 = vweird.f32 %v210
  %vm218 = vmor %vm216, %vm217
  %v219 = vsel %vm218, %v210, %v215
  %v220 = vrsqrt.pop %v187
  %v221 = vmul.f32 %v220, %v187
  %v222 = vmul.f32 %v221, %v220
  %v223 = vmul.f32 0.5, %v222
  %v224 = vsub.f32 1.5, %v223
  %v225 = vmul.f32 %v220, %v224
  %vm226 = vweird.f32 %v187
  %vm227 = vweird.f32 %v220
  %vm228 = vmor %vm226, %vm227
  %v229 = vsel %vm228, %v220, %v225
  %v230 = vrsqrt.pop %v188
  %v231 = vmul.f32 %v230, %v188
  %v232 = vmul.f32 %v231, %v230
  %v233 = vmul.f32 0.5, %v232
  %v234 = vsub.f32 1.5, %v233
  %v235 = vmul.f32 %v230, %v234
  %vm236 = vweird.f32 %v188
  %vm237 = vweird.f32 %v230
  %vm238 = vmor %vm236, %vm237
  %v239 = vsel %vm238, %v230, %v235
  %v240 = vrsqrt.pop %v189
  %v241 = vmul.f32 %v240, %v189
  %v242 = vmul.f32 %v241, %v240
  %v243 = vmul.f32 0.5, %v242
  %v244 = vsub.f32 1.5, %v243
  %v245 = vmul.f32 %v240, %v244
  %vm246 = vweird.f32 %v189
  %vm247 = vweird.f32 %v240
  %vm248 = vmor %vm246, %vm247
  %v249 = vsel %vm248, %v240, %v245
  %v250 = vmul.f32 %v148, %v199
  %v251 = vmul.f32 %v149, %v209
  %v252 = vmul.f32 %v150, %v219
  %v253 = vmul.f32 %v151, %v229
  %v254 = vmul.f32 %v152, %v239
  %v255 = vmul.f32 %v153, %v249
  %v256 = vld [vmem:[%s4] sm:$0x1]
  %v258 = vperm.slane %v256, 0
  %v260 = vmul.f32 %v250, %v258
  %v261 = vmul.f32 %v251, %v258
  %v262 = vmul.f32 %v252, %v258
  %v263 = vmul.f32 %v253, %v258
  %v264 = vmul.f32 %v254, %v258
  %v265 = vmul.f32 %v255, %v258
  %v266 = vld [vmem:[%s5] sm:$0x1]
  %v268 = vperm.slane %v266, 0
  %v270 = vadd.f32 %v260, %v268
  %v271 = vadd.f32 %v261, %v268
  %v272 = vadd.f32 %v262, %v268
  %v273 = vadd.f32 %v263, %v268
  %v274 = vadd.f32 %v264, %v268
  %v275 = vadd.f32 %v265, %v268
  %v276 = vpack.c.bf16 %v270, %v270
  %v277 = vpack.c.bf16 %v271, %v271
  %v278 = vpack.c.bf16 %v272, %v272
  %v279 = vpack.c.bf16 %v273, %v273
  %v280 = vpack.c.bf16 %v274, %v274
  %v281 = vpack.c.bf16 %v275, %v275
  %vm282 = vcmask 257024
  %283 = vst.msk [vmem:[%s6] sm:$0xf] %vm282, %v276
  %284 = vst.msk [vmem:[%s6 + $0x4] sm:$0xf] %vm282, %v277
  %285 = vst.msk [vmem:[%s6 + $0x8] sm:$0xf] %vm282, %v278
  %286 = vst.msk [vmem:[%s6 + $0xc] sm:$0xf] %vm282, %v279
  %287 = vst.msk [vmem:[%s6 + $0x10] sm:$0xf] %vm282, %v280
  %288 = vst.msk [vmem:[%s6 + $0x14] sm:$0xf] %vm282, %v281
  // Predicated region
  $region26: #{vit_forward.16} parent=0 // pred_check
    _
  $region27: #{vit_forward.16} parent=0 // pred_check_branch
    %290 = sbr.rel (0) target = $region29
  $region28: #{vit_forward.16} parent=0 // pred_region
    _
  $region29: #{vit_forward.16} parent=0 // pred_fallthru
    _
  // Predicated region
  $region30: #{vit_forward.16} parent=0 // pred_check
    _
  $region31: #{vit_forward.16} parent=0 // pred_check_branch
    %292 = sbr.rel (0) target = $region33
  $region32: #{vit_forward.16} parent=0 // pred_region
    _
  $region33: #{vit_forward.16} parent=0 // pred_fallthru
    _

// kernel: vit_forward.24
$region0: #{vit_forward.24}
  #allocation0 [shape = 'u32[]', space=smem, size = 0x4, offset = 0x4, fixed_abs, tag = 'smem constant byte address 0x4 - core index']
  #allocation1 [shape = 'u32[72,128]{1,0:T(1,128)}', space=vmem, size = 0x9000, scoped, tag = 'internal scratch']
  %s0 = inlined_call_operand.vmem [shape: bf16[2,32], index: 0, kind: input, shape index: {}]
  %s1 = inlined_call_operand.vmem [shape: f32[1,32], index: 1, kind: input, shape index: {}]
  %s2 = inlined_call_operand.vmem [shape: f32[1,32], index: 2, kind: input, shape index: {}]
  %s3 = inlined_call_operand.vmem [shape: bf16[2,32], index: 3, kind: output, shape index: {}]
  %s4 = sld [smem:[#allocation0]]
  $region22: #{vit_forward.24} parent=0
    _
  %s6 = ssub.s32 1, %s4
  %s7 = scalar_select 0, %s6, %s4
  // Predicated region
  $region2: #{vit_forward.24} parent=0 // pred_check
    _
  $region3: #{vit_forward.24} parent=0 // pred_check_branch
    %9 = sbr.rel (0) target = $region5
  $region4: #{vit_forward.24} parent=0 // pred_region
    _
  $region5: #{vit_forward.24} parent=0 // pred_fallthru
    _
  // Predicated region
  $region6: #{vit_forward.24} parent=0 // pred_check
    _
  $region7: #{vit_forward.24} parent=0 // pred_check_branch
    %11 = sbr.rel (0) target = $region9
  $region8: #{vit_forward.24} parent=0 // pred_region
    _
  $region9: #{vit_forward.24} parent=0 // pred_fallthru
    _
  // Predicated region
  $region10: #{vit_forward.24} parent=0 // pred_check
    _
  $region11: #{vit_forward.24} parent=0 // pred_check_branch
    %13 = sbr.rel (0) target = $region13
  $region12: #{vit_forward.24} parent=0 // pred_region
    _
  $region13: #{vit_forward.24} parent=0 // pred_fallthru
    _
  %v14 = vld [vmem:[%s0] sm:$0x1]
  %v15 = vunpack.c.l.bf16 %v14
  %vm16 = vcmask 254976
  %v17 = vsel %vm16, %v15, 0.0
  %18 = vadd.xlane.f32.xlu0 %v17
  %v19 = vpop.xlane.xlu0 %18
  %v20 = vrcp.pop 32.0
  %v21 = vmul.f32 32.0, %v20
  %v22 = vsub.f32 1.0, %v21
  %v23 = vmul.f32 %v20, %v22
  %v24 = vadd.f32 %v20, %v23
  %vm25 = vweird.f32 %v20
  %v26 = vsel %vm25, %v20, %v24
  %v27 = vmul.f32 %v19, %v26
  %v28 = vsub.f32 %v15, %v27
  %v29 = vmul.f32 %v28, %v28
  %v30 = vsel %vm16, %v29, 0.0
  %31 = vadd.xlane.f32.xlu0 %v30
  %v32 = vpop.xlane.xlu0 %31
  %v33 = vmul.f32 %v32, %v26
  %v34 = vadd.f32 %v33, 1e-06
  %v35 = vrsqrt.pop %v34
  %v36 = vmul.f32 %v35, %v34
  %v37 = vmul.f32 %v36, %v35
  %v38 = vmul.f32 0.5, %v37
  %v39 = vsub.f32 1.5, %v38
  %v40 = vmul.f32 %v35, %v39
  %vm41 = vweird.f32 %v34
  %vm42 = vweird.f32 %v35
  %vm43 = vmor %vm41, %vm42
  %v44 = vsel %vm43, %v35, %v40
  %v45 = vmul.f32 %v28, %v44
  %v46 = vld [vmem:[%s1] sm:$0x1]
  %v48 = vperm.slane %v46, 0
  %v50 = vmul.f32 %v45, %v48
  %v51 = vld [vmem:[%s2] sm:$0x1]
  %v53 = vperm.slane %v51, 0
  %v55 = vadd.f32 %v50, %v53
  %v56 = vpack.c.bf16 %v55, %v55
  %vm57 = vcmask 253952
  %58 = vst.msk [vmem:[%s3] sm:$0x1] %vm57, %v56
  // Predicated region
  $region14: #{vit_forward.24} parent=0 // pred_check
    _
  $region15: #{vit_forward.24} parent=0 // pred_check_branch
    %60 = sbr.rel (0) target = $region17
  $region16: #{vit_forward.24} parent=0 // pred_region
    _
  $region17: #{vit_forward.24} parent=0 // pred_fallthru
    _
  // Predicated region
  $region18: #{vit_forward.24} parent=0 // pred_check
    _
  $region19: #{vit_forward.24} parent=0 // pred_check_branch
    %62 = sbr.rel (0) target = $region21
  $region20: #{vit_forward.24} parent=0 // pred_region
    _
  $region21: #{vit_forward.24} parent=0 // pred_fallthru
    _

// kernel: vit_forward.18
$region0: #{vit_forward.18}
  #allocation0 [shape = 'u32[]', space=smem, size = 0x4, offset = 0x4, fixed_abs, tag = 'smem constant byte address 0x4 - core index']
  #allocation1 [shape = 'u32[72,128]{1,0:T(1,128)}', space=vmem, size = 0x9000, scoped, tag = 'internal scratch']
  %s0 = inlined_call_operand.vmem [shape: bf16[48,64], index: 0, kind: input, shape index: {}]
  %s1 = inlined_call_operand.vmem [shape: bf16[64,32], index: 1, kind: input, shape index: {}]
  %s2 = inlined_call_operand.vmem [shape: f32[1,32], index: 2, kind: input, shape index: {}]
  %s3 = inlined_call_operand.vmem [shape: bf16[48,32], index: 3, kind: input, shape index: {}]
  %s4 = inlined_call_operand.vmem [shape: f32[1,32], index: 4, kind: input, shape index: {}]
  %s5 = inlined_call_operand.vmem [shape: f32[1,32], index: 5, kind: input, shape index: {}]
  %s6 = inlined_call_operand.vmem [shape: bf16[48,32], index: 6, kind: output, shape index: {}]
  %s7 = sld [smem:[#allocation0]]
  $region34: #{vit_forward.18} parent=0
    _
  %s9 = ssub.s32 1, %s7
  %s10 = scalar_select 0, %s9, %s7
  // Predicated region
  $region2: #{vit_forward.18} parent=0 // pred_check
    _
  $region3: #{vit_forward.18} parent=0 // pred_check_branch
    %12 = sbr.rel (0) target = $region5
  $region4: #{vit_forward.18} parent=0 // pred_region
    _
  $region5: #{vit_forward.18} parent=0 // pred_fallthru
    _
  // Predicated region
  $region6: #{vit_forward.18} parent=0 // pred_check
    _
  $region7: #{vit_forward.18} parent=0 // pred_check_branch
    %14 = sbr.rel (0) target = $region9
  $region8: #{vit_forward.18} parent=0 // pred_region
    _
  $region9: #{vit_forward.18} parent=0 // pred_fallthru
    _
  // Predicated region
  $region10: #{vit_forward.18} parent=0 // pred_check
    _
  $region11: #{vit_forward.18} parent=0 // pred_check_branch
    %16 = sbr.rel (0) target = $region13
  $region12: #{vit_forward.18} parent=0 // pred_region
    _
  $region13: #{vit_forward.18} parent=0 // pred_fallthru
    _
  // Predicated region
  $region14: #{vit_forward.18} parent=0 // pred_check
    _
  $region15: #{vit_forward.18} parent=0 // pred_check_branch
    %18 = sbr.rel (0) target = $region17
  $region16: #{vit_forward.18} parent=0 // pred_region
    _
  $region17: #{vit_forward.18} parent=0 // pred_fallthru
    _
  // Predicated region
  $region18: #{vit_forward.18} parent=0 // pred_check
    _
  $region19: #{vit_forward.18} parent=0 // pred_check_branch
    %20 = sbr.rel (0) target = $region21
  $region20: #{vit_forward.18} parent=0 // pred_region
    _
  $region21: #{vit_forward.18} parent=0 // pred_fallthru
    _
  // Predicated region
  $region22: #{vit_forward.18} parent=0 // pred_check
    _
  $region23: #{vit_forward.18} parent=0 // pred_check_branch
    %22 = sbr.rel (0) target = $region25
  $region24: #{vit_forward.18} parent=0 // pred_region
    _
  $region25: #{vit_forward.18} parent=0 // pred_fallthru
    _
  %v24 = vld [vmem:[%s0] sm:$0xf]
  %v25 = vld [vmem:[%s0 + $0x4] sm:$0xf]
  %v26 = vld [vmem:[%s0 + $0x8] sm:$0xf]
  %v27 = vld [vmem:[%s0 + $0xc] sm:$0xf]
  %v28 = vld [vmem:[%s0 + $0x10] sm:$0xf]
  %v29 = vld [vmem:[%s0 + $0x14] sm:$0xf]
  %v30 = vld [vmem:[%s1] sm:$0xf]
  %v31 = vld [vmem:[%s1 + $0x4] sm:$0xf]
  %v32 = vld [vmem:[%s1 + $0x8] sm:$0xf]
  %v33 = vld [vmem:[%s1 + $0xc] sm:$0xf]
  %v34 = vld [vmem:[%s1 + $0x10] sm:$0xf]
  %v35 = vld [vmem:[%s1 + $0x14] sm:$0xf]
  %v36 = vld [vmem:[%s1 + $0x18] sm:$0xf]
  %v37 = vld [vmem:[%s1 + $0x1c] sm:$0xf]
  %v38 = vld [vmem:[%s2] sm:$0x1]
  %v40 = vperm.slane %v38, 0
  %v48 = vunpack.c.l.b16 %v24
  %v49 = vunpack.c.l.b16 %v25
  %v50 = vunpack.c.l.b16 %v26
  %v51 = vunpack.c.l.b16 %v27
  %v52 = vunpack.c.l.b16 %v28
  %v53 = vunpack.c.l.b16 %v29
  %v54 = vpack.c.b16 %v49, %v48
  %v55 = vpack.c.b16 %v51, %v50
  %v56 = vpack.c.b16 %v53, %v52
  %v65 = vunpack.c.l.b16 %v30
  %v66 = vunpack.c.l.b16 %v31
  %v67 = vunpack.c.l.b16 %v32
  %v68 = vunpack.c.l.b16 %v33
  %v69 = vunpack.c.l.b16 %v34
  %v70 = vunpack.c.l.b16 %v35
  %v71 = vunpack.c.l.b16 %v36
  %v72 = vunpack.c.l.b16 %v37
  %v73 = vpack.c.b16 %v66, %v65
  %v74 = vpack.c.b16 %v68, %v67
  %v75 = vpack.c.b16 %v70, %v69
  %v76 = vpack.c.b16 %v72, %v71
  %vm81 = vcmask 523264
  %v83 = vsel %vm81, %v54, 0
  %v86 = vsel %vm81, %v55, 0
  %v89 = vsel %vm81, %v56, 0
  %91 = vmatpush.bf16.msra.mxu0 0
  %92 = vmatpush.bf16.msra.mxu0 0
  %93 = vmatpush.bf16.msra.mxu0 0
  %94 = vmatpush.bf16.msra.mxu0 0
  %95 = vmatpush.bf16.msra.mxu0 %v76
  %96 = vmatpush.bf16.msra.mxu0 %v75
  %97 = vmatpush.bf16.msra.mxu0 %v74
  %98 = vmatpush.bf16.msra.mxu0 %v73
  %99 = vmatmul.bf16.gmra.mxu0 %v83
  %v100 = vpop.f32.mrf.mxu0
  %v101 = vadd.f32 %v40, %v100
  %v102 = vpop.f32.mrf.mxu0
  %v103 = vadd.f32 %v40, %v102
  %104 = vmatmul.bf16.gmra.mxu0 %v86
  %v105 = vpop.f32.mrf.mxu0
  %v106 = vadd.f32 %v40, %v105
  %v107 = vpop.f32.mrf.mxu0
  %v108 = vadd.f32 %v40, %v107
  %109 = vmatmul.bf16.gmra.mxu0 %v89
  %v110 = vpop.f32.mrf.mxu0
  %v111 = vadd.f32 %v40, %v110
  %v112 = vpop.f32.mrf.mxu0
  %v113 = vadd.f32 %v40, %v112
  %114 = vdwg.mxu0
  %v115 = vld [vmem:[%s3] sm:$0xf]
  %v116 = vld [vmem:[%s3 + $0x4] sm:$0xf]
  %v117 = vld [vmem:[%s3 + $0x8] sm:$0xf]
  %v118 = vld [vmem:[%s3 + $0xc] sm:$0xf]
  %v119 = vld [vmem:[%s3 + $0x10] sm:$0xf]
  %v120 = vld [vmem:[%s3 + $0x14] sm:$0xf]
  %v121 = vunpack.c.l.bf16 %v115
  %v122 = vunpack.c.l.bf16 %v116
  %v123 = vunpack.c.l.bf16 %v117
  %v124 = vunpack.c.l.bf16 %v118
  %v125 = vunpack.c.l.bf16 %v119
  %v126 = vunpack.c.l.bf16 %v120
  %v127 = vadd.f32 %v101, %v121
  %v128 = vadd.f32 %v103, %v122
  %v129 = vadd.f32 %v106, %v123
  %v130 = vadd.f32 %v108, %v124
  %v131 = vadd.f32 %v111, %v125
  %v132 = vadd.f32 %v113, %v126
  %vm133 = vcmask 261120
  %v134 = vsel %vm133, %v127, 0.0
  %135 = vadd.xlane.f32.xlu0 %v134
  %v136 = vpop.xlane.xlu0 %135
  %v137 = vsel %vm133, %v128, 0.0
  %138 = vadd.xlane.f32.xlu0 %v137
  %v139 = vpop.xlane.xlu0 %138
  %v140 = vsel %vm133, %v129, 0.0
  %141 = vadd.xlane.f32.xlu0 %v140
  %v142 = vpop.xlane.xlu0 %141
  %v143 = vsel %vm133, %v130, 0.0
  %144 = vadd.xlane.f32.xlu0 %v143
  %v145 = vpop.xlane.xlu0 %144
  %v146 = vsel %vm133, %v131, 0.0
  %147 = vadd.xlane.f32.xlu0 %v146
  %v148 = vpop.xlane.xlu0 %147
  %v149 = vsel %vm133, %v132, 0.0
  %150 = vadd.xlane.f32.xlu0 %v149
  %v151 = vpop.xlane.xlu0 %150
  %v152 = vrcp.pop 32.0
  %v153 = vmul.f32 32.0, %v152
  %v154 = vsub.f32 1.0, %v153
  %v155 = vmul.f32 %v152, %v154
  %v156 = vadd.f32 %v152, %v155
  %vm157 = vweird.f32 %v152
  %v158 = vsel %vm157, %v152, %v156
  %v159 = vmul.f32 %v136, %v158
  %v160 = vmul.f32 %v139, %v158
  %v161 = vmul.f32 %v142, %v158
  %v162 = vmul.f32 %v145, %v158
  %v163 = vmul.f32 %v148, %v158
  %v164 = vmul.f32 %v151, %v158
  %v165 = vsub.f32 %v127, %v159
  %v166 = vsub.f32 %v128, %v160
  %v167 = vsub.f32 %v129, %v161
  %v168 = vsub.f32 %v130, %v162
  %v169 = vsub.f32 %v131, %v163
  %v170 = vsub.f32 %v132, %v164
  %v171 = vmul.f32 %v165, %v165
  %v172 = vmul.f32 %v166, %v166
  %v173 = vmul.f32 %v167, %v167
  %v174 = vmul.f32 %v168, %v168
  %v175 = vmul.f32 %v169, %v169
  %v176 = vmul.f32 %v170, %v170
  %v177 = vsel %vm133, %v171, 0.0
  %178 = vadd.xlane.f32.xlu0 %v177
  %v179 = vpop.xlane.xlu0 %178
  %v180 = vsel %vm133, %v172, 0.0
  %181 = vadd.xlane.f32.xlu0 %v180
  %v182 = vpop.xlane.xlu0 %181
  %v183 = vsel %vm133, %v173, 0.0
  %184 = vadd.xlane.f32.xlu0 %v183
  %v185 = vpop.xlane.xlu0 %184
  %v186 = vsel %vm133, %v174, 0.0
  %187 = vadd.xlane.f32.xlu0 %v186
  %v188 = vpop.xlane.xlu0 %187
  %v189 = vsel %vm133, %v175, 0.0
  %190 = vadd.xlane.f32.xlu0 %v189
  %v191 = vpop.xlane.xlu0 %190
  %v192 = vsel %vm133, %v176, 0.0
  %193 = vadd.xlane.f32.xlu0 %v192
  %v194 = vpop.xlane.xlu0 %193
  %v195 = vmul.f32 %v179, %v158
  %v196 = vmul.f32 %v182, %v158
  %v197 = vmul.f32 %v185, %v158
  %v198 = vmul.f32 %v188, %v158
  %v199 = vmul.f32 %v191, %v158
  %v200 = vmul.f32 %v194, %v158
  %v201 = vadd.f32 %v195, 1e-05
  %v202 = vadd.f32 %v196, 1e-05
  %v203 = vadd.f32 %v197, 1e-05
  %v204 = vadd.f32 %v198, 1e-05
  %v205 = vadd.f32 %v199, 1e-05
  %v206 = vadd.f32 %v200, 1e-05
  %v207 = vrsqrt.pop %v201
  %v208 = vmul.f32 %v207, %v201
  %v209 = vmul.f32 %v208, %v207
  %v210 = vmul.f32 0.5, %v209
  %v211 = vsub.f32 1.5, %v210
  %v212 = vmul.f32 %v207, %v211
  %vm213 = vweird.f32 %v201
  %vm214 = vweird.f32 %v207
  %vm215 = vmor %vm213, %vm214
  %v216 = vsel %vm215, %v207, %v212
  %v217 = vrsqrt.pop %v202
  %v218 = vmul.f32 %v217, %v202
  %v219 = vmul.f32 %v218, %v217
  %v220 = vmul.f32 0.5, %v219
  %v221 = vsub.f32 1.5, %v220
  %v222 = vmul.f32 %v217, %v221
  %vm223 = vweird.f32 %v202
  %vm224 = vweird.f32 %v217
  %vm225 = vmor %vm223, %vm224
  %v226 = vsel %vm225, %v217, %v222
  %v227 = vrsqrt.pop %v203
  %v228 = vmul.f32 %v227, %v203
  %v229 = vmul.f32 %v228, %v227
  %v230 = vmul.f32 0.5, %v229
  %v231 = vsub.f32 1.5, %v230
  %v232 = vmul.f32 %v227, %v231
  %vm233 = vweird.f32 %v203
  %vm234 = vweird.f32 %v227
  %vm235 = vmor %vm233, %vm234
  %v236 = vsel %vm235, %v227, %v232
  %v237 = vrsqrt.pop %v204
  %v238 = vmul.f32 %v237, %v204
  %v239 = vmul.f32 %v238, %v237
  %v240 = vmul.f32 0.5, %v239
  %v241 = vsub.f32 1.5, %v240
  %v242 = vmul.f32 %v237, %v241
  %vm243 = vweird.f32 %v204
  %vm244 = vweird.f32 %v237
  %vm245 = vmor %vm243, %vm244
  %v246 = vsel %vm245, %v237, %v242
  %v247 = vrsqrt.pop %v205
  %v248 = vmul.f32 %v247, %v205
  %v249 = vmul.f32 %v248, %v247
  %v250 = vmul.f32 0.5, %v249
  %v251 = vsub.f32 1.5, %v250
  %v252 = vmul.f32 %v247, %v251
  %vm253 = vweird.f32 %v205
  %vm254 = vweird.f32 %v247
  %vm255 = vmor %vm253, %vm254
  %v256 = vsel %vm255, %v247, %v252
  %v257 = vrsqrt.pop %v206
  %v258 = vmul.f32 %v257, %v206
  %v259 = vmul.f32 %v258, %v257
  %v260 = vmul.f32 0.5, %v259
  %v261 = vsub.f32 1.5, %v260
  %v262 = vmul.f32 %v257, %v261
  %vm263 = vweird.f32 %v206
  %vm264 = vweird.f32 %v257
  %vm265 = vmor %vm263, %vm264
  %v266 = vsel %vm265, %v257, %v262
  %v267 = vmul.f32 %v165, %v216
  %v268 = vmul.f32 %v166, %v226
  %v269 = vmul.f32 %v167, %v236
  %v270 = vmul.f32 %v168, %v246
  %v271 = vmul.f32 %v169, %v256
  %v272 = vmul.f32 %v170, %v266
  %v273 = vld [vmem:[%s4] sm:$0x1]
  %v275 = vperm.slane %v273, 0
  %v277 = vmul.f32 %v267, %v275
  %v278 = vmul.f32 %v268, %v275
  %v279 = vmul.f32 %v269, %v275
  %v280 = vmul.f32 %v270, %v275
  %v281 = vmul.f32 %v271, %v275
  %v282 = vmul.f32 %v272, %v275
  %v283 = vld [vmem:[%s5] sm:$0x1]
  %v285 = vperm.slane %v283, 0
  %v287 = vadd.f32 %v277, %v285
  %v288 = vadd.f32 %v278, %v285
  %v289 = vadd.f32 %v279, %v285
  %v290 = vadd.f32 %v280, %v285
  %v291 = vadd.f32 %v281, %v285
  %v292 = vadd.f32 %v282, %v285
  %v293 = vpack.c.bf16 %v287, %v287
  %v294 = vpack.c.bf16 %v288, %v288
  %v295 = vpack.c.bf16 %v289, %v289
  %v296 = vpack.c.bf16 %v290, %v290
  %v297 = vpack.c.bf16 %v291, %v291
  %v298 = vpack.c.bf16 %v292, %v292
  %vm299 = vcmask 257024
  %300 = vst.msk [vmem:[%s6] sm:$0xf] %vm299, %v293
  %301 = vst.msk [vmem:[%s6 + $0x4] sm:$0xf] %vm299, %v294
  %302 = vst.msk [vmem:[%s6 + $0x8] sm:$0xf] %vm299, %v295
  %303 = vst.msk [vmem:[%s6 + $0xc] sm:$0xf] %vm299, %v296
  %304 = vst.msk [vmem:[%s6 + $0x10] sm:$0xf] %vm299, %v297
  %305 = vst.msk [vmem:[%s6 + $0x14] sm:$0xf] %vm299, %v298
  // Predicated region
  $region26: #{vit_forward.18} parent=0 // pred_check
    _
  $region27: #{vit_forward.18} parent=0 // pred_check_branch
    %307 = sbr.rel (0) target = $region29
  $region28: #{vit_forward.18} parent=0 // pred_region
    _
  $region29: #{vit_forward.18} parent=0 // pred_fallthru
    _
  // Predicated region
  $region30: #{vit_forward.18} parent=0 // pred_check
    _
  $region31: #{vit_forward.18} parent=0 // pred_check_branch
    %309 = sbr.rel (0) target = $region33
  $region32: #{vit_forward.18} parent=0 // pred_region
    _
  $region33: #{vit_forward.18} parent=0 // pred_fallthru
    _

// kernel: vit_forward.25
$region0: #{vit_forward.25}
  #allocation0 [shape = 'u32[]', space=smem, size = 0x4, offset = 0x4, fixed_abs, tag = 'smem constant byte address 0x4 - core index']
  #allocation1 [shape = 'u32[72,128]{1,0:T(1,128)}', space=vmem, size = 0x9000, scoped, tag = 'internal scratch']
  %s0 = inlined_call_operand.vmem [shape: bf16[2,32], index: 0, kind: input, shape index: {}]
  %s1 = inlined_call_operand.vmem [shape: bf16[32,10], index: 1, kind: input, shape index: {}]
  %s2 = inlined_call_operand.vmem [shape: f32[1,10], index: 2, kind: input, shape index: {}]
  %s3 = inlined_call_operand.hbm [shape: f32[2,10], index: 3, kind: output, shape index: {}]
  %s4 = sld [smem:[#allocation0]]
  $region22: #{vit_forward.25} parent=0
    _
  %s6 = ssub.s32 1, %s4
  %s7 = scalar_select 0, %s6, %s4
  $region1: #{vit_forward.25} parent=0
    #allocation2 [shape = 'u8[1024]{0}', space=vmem, size = 0x400, scoped, tag = 'output window, operand 0, single buffered']
    #allocation3 [shape = 's32[1]{0}', space=sflag, size = 0x4, scoped, tag = 'scoped memory for vit_forward.25']
    %8 = vsyncpa [#allocation3], 0
    // Predicated region
    $region2: #{vit_forward.25} parent=1 // pred_check
      _
    $region3: #{vit_forward.25} parent=1 // pred_check_branch
      %10 = sbr.rel (0) target = $region5
    $region4: #{vit_forward.25} parent=1 // pred_region
      _
    $region5: #{vit_forward.25} parent=1 // pred_fallthru
      _
    // Predicated region
    $region6: #{vit_forward.25} parent=1 // pred_check
      _
    $region7: #{vit_forward.25} parent=1 // pred_check_branch
      %12 = sbr.rel (0) target = $region9
    $region8: #{vit_forward.25} parent=1 // pred_region
      _
    $region9: #{vit_forward.25} parent=1 // pred_fallthru
      _
    // Predicated region
    $region10: #{vit_forward.25} parent=1 // pred_check
      _
    $region11: #{vit_forward.25} parent=1 // pred_check_branch
      %14 = sbr.rel (0) target = $region13
    $region12: #{vit_forward.25} parent=1 // pred_region
      _
    $region13: #{vit_forward.25} parent=1 // pred_fallthru
      _
    %v16 = vld [vmem:[%s0] sm:$0x1]
    %v17 = vld [vmem:[%s1] sm:$0xf]
    %v18 = vld [vmem:[%s1 + $0x4] sm:$0xf]
    %v19 = vld [vmem:[%s1 + $0x8] sm:$0xf]
    %v20 = vld [vmem:[%s1 + $0xc] sm:$0xf]
    %v21 = vld [vmem:[%s2] sm:$0x1]
    %v23 = vperm.slane %v21, 0
    %v29 = vunpack.c.l.b16 %v17
    %v30 = vunpack.c.l.b16 %v18
    %v31 = vunpack.c.l.b16 %v19
    %v32 = vunpack.c.l.b16 %v20
    %v33 = vpack.c.b16 %v30, %v29
    %v34 = vpack.c.b16 %v32, %v31
    %vm37 = vcmask 261120
    %v39 = vsel %vm37, %v16, 0
    %41 = vmatpush.bf16.msra.mxu0 0
    %42 = vmatpush.bf16.msra.mxu0 0
    %43 = vmatpush.bf16.msra.mxu0 0
    %44 = vmatpush.bf16.msra.mxu0 0
    %45 = vmatpush.bf16.msra.mxu0 0
    %46 = vmatpush.bf16.msra.mxu0 0
    %47 = vmatpush.bf16.msra.mxu0 %v34
    %48 = vmatpush.bf16.msra.mxu0 %v33
    %49 = vmatmul.bf16.gmra.mxu0 %v39
    %v50 = vpop.f32.mrf.mxu0
    %v51 = vadd.f32 %v23, %v50
    %v52 = vpop.f32.mrf.mxu0
    %53 = vdwg.mxu0
    %vm54 = vcmask 74752
    %55 = vst.msk [vmem:[#allocation2] sm:$0x3] %vm54, %v51
    // Predicated region
    $region14: #{vit_forward.25} parent=1 // pred_check
      _
    $region15: #{vit_forward.25} parent=1 // pred_check_branch
      %57 = sbr.rel (0) target = $region17
    $region16: #{vit_forward.25} parent=1 // pred_region
      %59 = vsyncadd [#allocation3], 0
      %s61 = sshll.u32 [#allocation2], 4
      %s62 = int_to_ptr.vmem [resolvable:$true] %s61
      %s63 = sshll.u32 %s3, 4
      %s64 = int_to_ptr.hbm [resolvable:$true] %s63
      %66 = dma.vmem_to_hbm [thread:$0]  %s62, 32, %s64, [#allocation3]
    $region17: #{vit_forward.25} parent=1 // pred_fallthru
      _
    // Predicated region
    $region18: #{vit_forward.25} parent=1 // pred_check
      _
    $region19: #{vit_forward.25} parent=1 // pred_check_branch
      %68 = sbr.rel (0) target = $region21
    $region20: #{vit_forward.25} parent=1 // pred_region
      %70 = dma.done [#allocation3], 32
    $region21: #{vit_forward.25} parent=1 // pred_fallthru
      _
    %71 = vsyncpa [#allocation3], 1

</llo_original>
